<compile_context>
chip_gen: v6e
topology: v6e:2x2x1
jax: 0.10.0
libtpu: 0.0.40
codegen_flags: <defaults>
</compile_context>

<pallas_src>
import functools
import math

import jax
import jax.numpy as jnp
from jax import lax
from jax.experimental import pallas as pl
from jax.experimental.pallas import tpu as pltpu


# ----------------------------------------------------------------------------
# Fused attention kernel.  Grid = (B,); all heads handled inside the body.
# ----------------------------------------------------------------------------
def caa_kernel(q_ref, k_ref, v_ref, cplx_ref,
               wq_ref, bq_ref, wk_ref, bk_ref, wv_ref, bv_ref,
               wo_ref, bo_ref, gamma_ref, beta_ref, pen_ref,
               out_ref, *, n_heads: int, compute_dtype):
    D = wq_ref.shape[0]
    dk = D // n_heads
    scale = 1.0 / math.sqrt(dk)

    q = q_ref[0]                                           # (S, D), f32

    qc = q.astype(compute_dtype)
    kc = k_ref[0].astype(compute_dtype)
    vc = v_ref[0].astype(compute_dtype)

    # Full-width projections: (S, D) @ (D, D) on the MXU with f32 accumulation.
    # The 1/sqrt(d_k) scale is folded into Q (S*D multiplies, not S*S per head).
    Q = (jnp.dot(qc, wq_ref[...].astype(compute_dtype),
                 preferred_element_type=jnp.float32) + bq_ref[...]) * scale
    K = jnp.dot(kc, wk_ref[...].astype(compute_dtype),
                preferred_element_type=jnp.float32) + bk_ref[...]
    V = jnp.dot(vc, wv_ref[...].astype(compute_dtype),
                preferred_element_type=jnp.float32) + bv_ref[...]

    # Per-key complexity penalty, broadcast across query rows (and heads).
    penalty = pen_ref[0, 0] * cplx_ref[0]                  # (1, S)

    # Statically unrolled head loop; heads occupy contiguous lane slices of Q/K/V.
    ctx_heads = []
    for h in range(n_heads):
        sl = slice(h * dk, (h + 1) * dk)
        Qh, Kh, Vh = Q[:, sl], K[:, sl], V[:, sl]          # (S, dk)

        # scores = Qh @ Kh^T (contract d_k; scale already folded into Q)
        scores = lax.dot_general(Qh, Kh, (((1,), (1,)), ((), ())),
                                 preferred_element_type=jnp.float32)   # (S, S)
        scores = scores - penalty
        # TODO(synk): optional mask (mask == 0 -> -1e9) not supported in this kernel.

        # Numerically stable softmax with deferred normalization: normalize the
        # (S, dk) context instead of the (S, S) probability matrix.
        m = jnp.max(scores, axis=-1, keepdims=True)
        e = jnp.exp(scores - m)
        denom = jnp.sum(e, axis=-1, keepdims=True)                     # (S, 1)
        ctx_un = jnp.dot(e.astype(compute_dtype), Vh.astype(compute_dtype),
                         preferred_element_type=jnp.float32)           # (S, dk)
        ctx_heads.append(ctx_un * pl.reciprocal(denom, approx=False))

    ctx = jnp.concatenate(ctx_heads, axis=-1)              # (S, D), heads on lanes

    # Single full-width output projection, bias, residual, LayerNorm.
    out = jnp.dot(ctx.astype(compute_dtype), wo_ref[...].astype(compute_dtype),
                  preferred_element_type=jnp.float32) + bo_ref[...]
    res = out + q
    mean = jnp.mean(res, axis=-1, keepdims=True)
    var = jnp.mean((res - mean) ** 2, axis=-1, keepdims=True)
    normed = (res - mean) * lax.rsqrt(var + 1e-5)
    out_ref[0] = (normed * gamma_ref[...] + beta_ref[...]).astype(out_ref.dtype)


# ----------------------------------------------------------------------------
# Wrapper: one pallas_call, grid = (B,), weights resident in VMEM.
# ----------------------------------------------------------------------------
def complexity_aware_attention(params, query, key, value, complexity, mask=None,
                               compute_dtype=jnp.float32):
    if mask is not None:
        # TODO(synk): plumb the optional mask as an extra (B, S, S) additive bias input.
        raise NotImplementedError("mask is not supported by this kernel")

    B, S, D = query.shape
    H = params["n_heads"]

    bq = params["bq"].reshape(1, D)
    bk = params["bk"].reshape(1, D)
    bv = params["bv"].reshape(1, D)
    bo = params["bo"].reshape(1, D)
    gamma = params["ln_gamma"].reshape(1, D)
    beta = params["ln_beta"].reshape(1, D)
    pen = params["penalty"].reshape(1, 1).astype(jnp.float32)
    cplx = complexity.reshape(B, 1, S).astype(jnp.float32)

    bsd_spec = pl.BlockSpec((1, S, D), lambda b: (b, 0, 0))
    # Grid-invariant weight / bias blocks: constant block index -> fetched once,
    # kept VMEM-resident across the whole batch loop.
    w_spec = pl.BlockSpec((D, D), lambda b: (0, 0))
    row_spec = pl.BlockSpec((1, D), lambda b: (0, 0))

    out = pl.pallas_call(
        functools.partial(caa_kernel, n_heads=H, compute_dtype=compute_dtype),
        out_shape=jax.ShapeDtypeStruct((B, S, D), jnp.float32),
        grid_spec=pltpu.PrefetchScalarGridSpec(
            num_scalar_prefetch=0,
            grid=(B,),
            in_specs=[
                bsd_spec, bsd_spec, bsd_spec,                       # q, k, v
                pl.BlockSpec((1, 1, S), lambda b: (b, 0, 0)),       # complexity
                w_spec, row_spec,                                   # wq, bq
                w_spec, row_spec,                                   # wk, bk
                w_spec, row_spec,                                   # wv, bv
                w_spec, row_spec,                                   # wo, bo
                row_spec, row_spec,                                 # gamma, beta
                pl.BlockSpec(memory_space=pltpu.MemorySpace.SMEM),  # penalty scalar
            ],
            out_specs=pl.BlockSpec((1, S, D), lambda b: (b, 0, 0)),
        ),
        compiler_params=pltpu.CompilerParams(
            dimension_semantics=("parallel",)),
    )(query, key, value, cplx,
      params["wq"], bq, params["wk"], bk, params["wv"], bv,
      params["wo"], bo, gamma, beta, pen)
    return out


# ----------------------------------------------------------------------------
# Parameter init (weights stored as (in, out): x @ W == PyTorch x @ W.T)
# ----------------------------------------------------------------------------
def init_params(rng, d_model, n_heads):
    ks = jax.random.split(rng, 10)
    s = 0.1
    return {
        "n_heads": n_heads,
        "wq": jax.random.normal(ks[0], (d_model, d_model), jnp.float32) * s,
        "bq": jax.random.normal(ks[1], (d_model,), jnp.float32) * s,
        "wk": jax.random.normal(ks[2], (d_model, d_model), jnp.float32) * s,
        "bk": jax.random.normal(ks[3], (d_model,), jnp.float32) * s,
        "wv": jax.random.normal(ks[4], (d_model, d_model), jnp.float32) * s,
        "bv": jax.random.normal(ks[5], (d_model,), jnp.float32) * s,
        "wo": jax.random.normal(ks[6], (d_model, d_model), jnp.float32) * s,
        "bo": jax.random.normal(ks[7], (d_model,), jnp.float32) * s,
        "ln_gamma": 1.0 + jax.random.normal(ks[8], (d_model,), jnp.float32) * s,
        "ln_beta": jax.random.normal(ks[9], (d_model,), jnp.float32) * s,
        "penalty": jnp.array(1.0, jnp.float32),   # nn.Parameter(torch.tensor(1.0))
    }


# ----------------------------------------------------------------------------
# Pure-JAX reference (mirrors the PyTorch forward, eval mode)
# ----------------------------------------------------------------------------
def reference_forward(params, query, key, value, complexity, mask=None):
    B, S, D = query.shape
    H = params["n_heads"]
    dk = D // H
    Q = query @ params["wq"] + params["bq"]
    K = key @ params["wk"] + params["bk"]
    V = value @ params["wv"] + params["bv"]
    Qh = Q.reshape(B, S, H, dk).transpose(0, 2, 1, 3)
    Kh = K.reshape(B, S, H, dk).transpose(0, 2, 1, 3)
    Vh = V.reshape(B, S, H, dk).transpose(0, 2, 1, 3)
    scores = jnp.einsum("bhqd,bhkd->bhqk", Qh, Kh) / math.sqrt(dk)
    scores = scores - params["penalty"] * complexity[:, None, None, :]
    if mask is not None:
        scores = jnp.where(mask == 0, -1e9, scores)
    attn = jax.nn.softmax(scores, axis=-1)
    ctx = jnp.einsum("bhqk,bhkd->bhqd", attn, Vh)
    ctx = ctx.transpose(0, 2, 1, 3).reshape(B, S, D)
    out = ctx @ params["wo"] + params["bo"]
    res = out + query
    mean = res.mean(-1, keepdims=True)
    var = ((res - mean) ** 2).mean(-1, keepdims=True)
    normed = (res - mean) / jnp.sqrt(var + 1e-5)
    return normed * params["ln_gamma"] + params["ln_beta"]


if __name__ == "__main__":
    B, S = 2, 8
    d_model, n_heads = 32, 8

    root = jax.random.PRNGKey(0)
    kp, kq, kk, kv, kc = jax.random.split(root, 5)

    params = init_params(kp, d_model, n_heads)
    query = jax.random.normal(kq, (B, S, d_model), jnp.float32)
    key_in = jax.random.normal(kk, (B, S, d_model), jnp.float32)
    value = jax.random.normal(kv, (B, S, d_model), jnp.float32)
    complexity = jax.random.uniform(kc, (B, S), jnp.float32)

    # f32 compute so the 1e-4 check holds; pass compute_dtype=jnp.bfloat16 on
    # v6e/v7x production deployments for bf16-native MXU + halved VMEM footprint.
    out = complexity_aware_attention(params, query, key_in, value, complexity)
    out = jax.block_until_ready(out)

    ref = reference_forward(params, query, key_in, value, complexity)
    assert out.shape == (B, S, d_model), out.shape
    max_err = float(jnp.max(jnp.abs(out - ref)))
    assert jnp.allclose(out, ref, atol=1e-4, rtol=1e-4), f"mismatch, max_err={max_err}"

    print("KERNEL_OK")
</pallas_src>

<mosaic_0001>
module attributes {stable_mosaic.version = 11 : i64} {
  func.func @caa_kernel(%arg0: i32, %arg1: memref<1x8x32xf32, #tpu.memory_space<vmem>>, %arg2: memref<1x8x32xf32, #tpu.memory_space<vmem>>, %arg3: memref<1x8x32xf32, #tpu.memory_space<vmem>>, %arg4: memref<1x1x8xf32, #tpu.memory_space<vmem>>, %arg5: memref<32x32xf32, #tpu.memory_space<vmem>>, %arg6: memref<1x32xf32, #tpu.memory_space<vmem>>, %arg7: memref<32x32xf32, #tpu.memory_space<vmem>>, %arg8: memref<1x32xf32, #tpu.memory_space<vmem>>, %arg9: memref<32x32xf32, #tpu.memory_space<vmem>>, %arg10: memref<1x32xf32, #tpu.memory_space<vmem>>, %arg11: memref<32x32xf32, #tpu.memory_space<vmem>>, %arg12: memref<1x32xf32, #tpu.memory_space<vmem>>, %arg13: memref<1x32xf32, #tpu.memory_space<vmem>>, %arg14: memref<1x32xf32, #tpu.memory_space<vmem>>, %arg15: memref<1x1xf32, #tpu.memory_space<smem>>, %arg16: memref<1x8x32xf32, #tpu.memory_space<vmem>>) attributes {dimension_semantics = [#tpu.dimension_semantics<parallel>], iteration_bounds = array<i64: 2>, scalar_prefetch = 0 : i64, scratch_operands = 0 : i64, tpu.core_type = #tpu.core_type<tc>, window_params = [{transform_indices = @transform_0, window_bounds = array<i64: 1, 8, 32>}, {transform_indices = @transform_1, window_bounds = array<i64: 1, 8, 32>}, {transform_indices = @transform_2, window_bounds = array<i64: 1, 8, 32>}, {transform_indices = @transform_3, window_bounds = array<i64: 1, 1, 8>}, {pipeline_mode = #tpu.pipeline_mode<synchronous>, transform_indices = @transform_4, window_bounds = array<i64: 32, 32>}, {pipeline_mode = #tpu.pipeline_mode<synchronous>, transform_indices = @transform_5, window_bounds = array<i64: 1, 32>}, {pipeline_mode = #tpu.pipeline_mode<synchronous>, transform_indices = @transform_6, window_bounds = array<i64: 32, 32>}, {pipeline_mode = #tpu.pipeline_mode<synchronous>, transform_indices = @transform_7, window_bounds = array<i64: 1, 32>}, {pipeline_mode = #tpu.pipeline_mode<synchronous>, transform_indices = @transform_8, window_bounds = array<i64: 32, 32>}, {pipeline_mode = #tpu.pipeline_mode<synchronous>, transform_indices = @transform_9, window_bounds = array<i64: 1, 32>}, {pipeline_mode = #tpu.pipeline_mode<synchronous>, transform_indices = @transform_10, window_bounds = array<i64: 32, 32>}, {pipeline_mode = #tpu.pipeline_mode<synchronous>, transform_indices = @transform_11, window_bounds = array<i64: 1, 32>}, {pipeline_mode = #tpu.pipeline_mode<synchronous>, transform_indices = @transform_12, window_bounds = array<i64: 1, 32>}, {pipeline_mode = #tpu.pipeline_mode<synchronous>, transform_indices = @transform_13, window_bounds = array<i64: 1, 32>}, {transform_indices = @transform_14, window_bounds = array<i64: 1, 1>}, {transform_indices = @transform_15, window_bounds = array<i64: 1, 8, 32>}]} {
    %c0 = arith.constant 0 : index
    %c0_0 = arith.constant 0 : index
    %c0_1 = arith.constant 0 : index
    %0 = vector.load %arg1[%c0, %c0_0, %c0_1] : memref<1x8x32xf32, #tpu.memory_space<vmem>>, vector<1x8x32xf32>
    %1 = vector.shape_cast %0 : vector<1x8x32xf32> to vector<8x32xf32>
    %c0_2 = arith.constant 0 : index
    %c0_3 = arith.constant 0 : index
    %c0_4 = arith.constant 0 : index
    %2 = vector.load %arg2[%c0_2, %c0_3, %c0_4] : memref<1x8x32xf32, #tpu.memory_space<vmem>>, vector<1x8x32xf32>
    %3 = vector.shape_cast %2 : vector<1x8x32xf32> to vector<8x32xf32>
    %c0_5 = arith.constant 0 : index
    %c0_6 = arith.constant 0 : index
    %c0_7 = arith.constant 0 : index
    %4 = vector.load %arg3[%c0_5, %c0_6, %c0_7] : memref<1x8x32xf32, #tpu.memory_space<vmem>>, vector<1x8x32xf32>
    %5 = vector.shape_cast %4 : vector<1x8x32xf32> to vector<8x32xf32>
    %c0_8 = arith.constant 0 : index
    %c0_9 = arith.constant 0 : index
    %6 = vector.load %arg5[%c0_8, %c0_9] : memref<32x32xf32, #tpu.memory_space<vmem>>, vector<32x32xf32>
    %cst = arith.constant dense<0.000000e+00> : vector<8x32xf32>
    %7 = tpu.matmul %1, %6, %cst {dimension_numbers = #tpu.dot_dimension_numbers<[1], [0], [0], [1], [0, 0, 1, 1], [], []>} : vector<8x32xf32>, vector<32x32xf32>, vector<8x32xf32> -> vector<8x32xf32>
    %c0_10 = arith.constant 0 : index
    %c0_11 = arith.constant 0 : index
    %8 = vector.load %arg6[%c0_10, %c0_11] : memref<1x32xf32, #tpu.memory_space<vmem>>, vector<1x32xf32>
    %9 = vector.broadcast %8 : vector<1x32xf32> to vector<8x32xf32>
    %10 = arith.addf %7, %9 : vector<8x32xf32>
    %cst_12 = arith.constant 5.000000e-01 : f32
    %11 = vector.broadcast %cst_12 : f32 to vector<8x32xf32>
    %12 = arith.mulf %10, %11 : vector<8x32xf32>
    %c0_13 = arith.constant 0 : index
    %c0_14 = arith.constant 0 : index
    %13 = vector.load %arg7[%c0_13, %c0_14] : memref<32x32xf32, #tpu.memory_space<vmem>>, vector<32x32xf32>
    %cst_15 = arith.constant dense<0.000000e+00> : vector<8x32xf32>
    %14 = tpu.matmul %3, %13, %cst_15 {dimension_numbers = #tpu.dot_dimension_numbers<[1], [0], [0], [1], [0, 0, 1, 1], [], []>} : vector<8x32xf32>, vector<32x32xf32>, vector<8x32xf32> -> vector<8x32xf32>
    %c0_16 = arith.constant 0 : index
    %c0_17 = arith.constant 0 : index
    %15 = vector.load %arg8[%c0_16, %c0_17] : memref<1x32xf32, #tpu.memory_space<vmem>>, vector<1x32xf32>
    %16 = vector.broadcast %15 : vector<1x32xf32> to vector<8x32xf32>
    %17 = arith.addf %14, %16 : vector<8x32xf32>
    %c0_18 = arith.constant 0 : index
    %c0_19 = arith.constant 0 : index
    %18 = vector.load %arg9[%c0_18, %c0_19] : memref<32x32xf32, #tpu.memory_space<vmem>>, vector<32x32xf32>
    %cst_20 = arith.constant dense<0.000000e+00> : vector<8x32xf32>
    %19 = tpu.matmul %5, %18, %cst_20 {dimension_numbers = #tpu.dot_dimension_numbers<[1], [0], [0], [1], [0, 0, 1, 1], [], []>} : vector<8x32xf32>, vector<32x32xf32>, vector<8x32xf32> -> vector<8x32xf32>
    %c0_21 = arith.constant 0 : index
    %c0_22 = arith.constant 0 : index
    %20 = vector.load %arg10[%c0_21, %c0_22] : memref<1x32xf32, #tpu.memory_space<vmem>>, vector<1x32xf32>
    %21 = vector.broadcast %20 : vector<1x32xf32> to vector<8x32xf32>
    %22 = arith.addf %19, %21 : vector<8x32xf32>
    %c0_23 = arith.constant 0 : index
    %c0_24 = arith.constant 0 : index
    %23 = memref.load %arg15[%c0_23, %c0_24] : memref<1x1xf32, #tpu.memory_space<smem>>
    %c0_25 = arith.constant 0 : index
    %c0_26 = arith.constant 0 : index
    %c0_27 = arith.constant 0 : index
    %24 = vector.load %arg4[%c0_25, %c0_26, %c0_27] : memref<1x1x8xf32, #tpu.memory_space<vmem>>, vector<1x1x8xf32>
    %25 = vector.shape_cast %24 : vector<1x1x8xf32> to vector<1x8xf32>
    %26 = vector.broadcast %23 : f32 to vector<1x8xf32>
    %27 = arith.mulf %26, %25 : vector<1x8xf32>
    %28 = vector.extract_strided_slice %12 {offsets = [0, 0], sizes = [8, 4], strides = [1, 1]} : vector<8x32xf32> to vector<8x4xf32>
    %29 = vector.extract_strided_slice %17 {offsets = [0, 0], sizes = [8, 4], strides = [1, 1]} : vector<8x32xf32> to vector<8x4xf32>
    %30 = vector.extract_strided_slice %22 {offsets = [0, 0], sizes = [8, 4], strides = [1, 1]} : vector<8x32xf32> to vector<8x4xf32>
    %cst_28 = arith.constant dense<0.000000e+00> : vector<8x8xf32>
    %31 = tpu.matmul %28, %29, %cst_28 {dimension_numbers = #tpu.dot_dimension_numbers<[1], [1], [0], [0], [0, 0, 1, 0], [], []>} : vector<8x4xf32>, vector<8x4xf32>, vector<8x8xf32> -> vector<8x8xf32>
    %32 = vector.broadcast %27 : vector<1x8xf32> to vector<8x8xf32>
    %33 = arith.subf %31, %32 : vector<8x8xf32>
    %cst_29 = arith.constant dense<0xFF800000> : vector<8xf32>
    %34 = vector.multi_reduction <maximumf>, %33, %cst_29 [1] : vector<8x8xf32> to vector<8xf32>
    %35 = vector.shape_cast %34 : vector<8xf32> to vector<8x1xf32>
    %36 = vector.broadcast %35 : vector<8x1xf32> to vector<8x8xf32>
    %37 = arith.subf %33, %36 : vector<8x8xf32>
    %38 = math.exp %37 : vector<8x8xf32>
    %cst_30 = arith.constant dense<0.000000e+00> : vector<8xf32>
    %39 = vector.multi_reduction <add>, %38, %cst_30 [1] : vector<8x8xf32> to vector<8xf32>
    %40 = vector.shape_cast %39 : vector<8xf32> to vector<8x1xf32>
    %cst_31 = arith.constant dense<0.000000e+00> : vector<8x4xf32>
    %41 = tpu.matmul %38, %30, %cst_31 {dimension_numbers = #tpu.dot_dimension_numbers<[1], [0], [0], [1], [0, 0, 1, 1], [], []>} : vector<8x8xf32>, vector<8x4xf32>, vector<8x4xf32> -> vector<8x4xf32>
    %42 = tpu.reciprocal %40 : vector<8x1xf32> -> vector<8x1xf32>
    %43 = vector.broadcast %42 : vector<8x1xf32> to vector<8x4xf32>
    %44 = arith.mulf %41, %43 : vector<8x4xf32>
    %45 = vector.extract_strided_slice %12 {offsets = [0, 4], sizes = [8, 4], strides = [1, 1]} : vector<8x32xf32> to vector<8x4xf32>
    %46 = vector.extract_strided_slice %17 {offsets = [0, 4], sizes = [8, 4], strides = [1, 1]} : vector<8x32xf32> to vector<8x4xf32>
    %47 = vector.extract_strided_slice %22 {offsets = [0, 4], sizes = [8, 4], strides = [1, 1]} : vector<8x32xf32> to vector<8x4xf32>
    %cst_32 = arith.constant dense<0.000000e+00> : vector<8x8xf32>
    %48 = tpu.matmul %45, %46, %cst_32 {dimension_numbers = #tpu.dot_dimension_numbers<[1], [1], [0], [0], [0, 0, 1, 0], [], []>} : vector<8x4xf32>, vector<8x4xf32>, vector<8x8xf32> -> vector<8x8xf32>
    %49 = vector.broadcast %27 : vector<1x8xf32> to vector<8x8xf32>
    %50 = arith.subf %48, %49 : vector<8x8xf32>
    %cst_33 = arith.constant dense<0xFF800000> : vector<8xf32>
    %51 = vector.multi_reduction <maximumf>, %50, %cst_33 [1] : vector<8x8xf32> to vector<8xf32>
    %52 = vector.shape_cast %51 : vector<8xf32> to vector<8x1xf32>
    %53 = vector.broadcast %52 : vector<8x1xf32> to vector<8x8xf32>
    %54 = arith.subf %50, %53 : vector<8x8xf32>
    %55 = math.exp %54 : vector<8x8xf32>
    %cst_34 = arith.constant dense<0.000000e+00> : vector<8xf32>
    %56 = vector.multi_reduction <add>, %55, %cst_34 [1] : vector<8x8xf32> to vector<8xf32>
    %57 = vector.shape_cast %56 : vector<8xf32> to vector<8x1xf32>
    %cst_35 = arith.constant dense<0.000000e+00> : vector<8x4xf32>
    %58 = tpu.matmul %55, %47, %cst_35 {dimension_numbers = #tpu.dot_dimension_numbers<[1], [0], [0], [1], [0, 0, 1, 1], [], []>} : vector<8x8xf32>, vector<8x4xf32>, vector<8x4xf32> -> vector<8x4xf32>
    %59 = tpu.reciprocal %57 : vector<8x1xf32> -> vector<8x1xf32>
    %60 = vector.broadcast %59 : vector<8x1xf32> to vector<8x4xf32>
    %61 = arith.mulf %58, %60 : vector<8x4xf32>
    %62 = vector.extract_strided_slice %12 {offsets = [0, 8], sizes = [8, 4], strides = [1, 1]} : vector<8x32xf32> to vector<8x4xf32>
    %63 = vector.extract_strided_slice %17 {offsets = [0, 8], sizes = [8, 4], strides = [1, 1]} : vector<8x32xf32> to vector<8x4xf32>
    %64 = vector.extract_strided_slice %22 {offsets = [0, 8], sizes = [8, 4], strides = [1, 1]} : vector<8x32xf32> to vector<8x4xf32>
    %cst_36 = arith.constant dense<0.000000e+00> : vector<8x8xf32>
    %65 = tpu.matmul %62, %63, %cst_36 {dimension_numbers = #tpu.dot_dimension_numbers<[1], [1], [0], [0], [0, 0, 1, 0], [], []>} : vector<8x4xf32>, vector<8x4xf32>, vector<8x8xf32> -> vector<8x8xf32>
    %66 = vector.broadcast %27 : vector<1x8xf32> to vector<8x8xf32>
    %67 = arith.subf %65, %66 : vector<8x8xf32>
    %cst_37 = arith.constant dense<0xFF800000> : vector<8xf32>
    %68 = vector.multi_reduction <maximumf>, %67, %cst_37 [1] : vector<8x8xf32> to vector<8xf32>
    %69 = vector.shape_cast %68 : vector<8xf32> to vector<8x1xf32>
    %70 = vector.broadcast %69 : vector<8x1xf32> to vector<8x8xf32>
    %71 = arith.subf %67, %70 : vector<8x8xf32>
    %72 = math.exp %71 : vector<8x8xf32>
    %cst_38 = arith.constant dense<0.000000e+00> : vector<8xf32>
    %73 = vector.multi_reduction <add>, %72, %cst_38 [1] : vector<8x8xf32> to vector<8xf32>
    %74 = vector.shape_cast %73 : vector<8xf32> to vector<8x1xf32>
    %cst_39 = arith.constant dense<0.000000e+00> : vector<8x4xf32>
    %75 = tpu.matmul %72, %64, %cst_39 {dimension_numbers = #tpu.dot_dimension_numbers<[1], [0], [0], [1], [0, 0, 1, 1], [], []>} : vector<8x8xf32>, vector<8x4xf32>, vector<8x4xf32> -> vector<8x4xf32>
    %76 = tpu.reciprocal %74 : vector<8x1xf32> -> vector<8x1xf32>
    %77 = vector.broadcast %76 : vector<8x1xf32> to vector<8x4xf32>
    %78 = arith.mulf %75, %77 : vector<8x4xf32>
    %79 = vector.extract_strided_slice %12 {offsets = [0, 12], sizes = [8, 4], strides = [1, 1]} : vector<8x32xf32> to vector<8x4xf32>
    %80 = vector.extract_strided_slice %17 {offsets = [0, 12], sizes = [8, 4], strides = [1, 1]} : vector<8x32xf32> to vector<8x4xf32>
    %81 = vector.extract_strided_slice %22 {offsets = [0, 12], sizes = [8, 4], strides = [1, 1]} : vector<8x32xf32> to vector<8x4xf32>
    %cst_40 = arith.constant dense<0.000000e+00> : vector<8x8xf32>
    %82 = tpu.matmul %79, %80, %cst_40 {dimension_numbers = #tpu.dot_dimension_numbers<[1], [1], [0], [0], [0, 0, 1, 0], [], []>} : vector<8x4xf32>, vector<8x4xf32>, vector<8x8xf32> -> vector<8x8xf32>
    %83 = vector.broadcast %27 : vector<1x8xf32> to vector<8x8xf32>
    %84 = arith.subf %82, %83 : vector<8x8xf32>
    %cst_41 = arith.constant dense<0xFF800000> : vector<8xf32>
    %85 = vector.multi_reduction <maximumf>, %84, %cst_41 [1] : vector<8x8xf32> to vector<8xf32>
    %86 = vector.shape_cast %85 : vector<8xf32> to vector<8x1xf32>
    %87 = vector.broadcast %86 : vector<8x1xf32> to vector<8x8xf32>
    %88 = arith.subf %84, %87 : vector<8x8xf32>
    %89 = math.exp %88 : vector<8x8xf32>
    %cst_42 = arith.constant dense<0.000000e+00> : vector<8xf32>
    %90 = vector.multi_reduction <add>, %89, %cst_42 [1] : vector<8x8xf32> to vector<8xf32>
    %91 = vector.shape_cast %90 : vector<8xf32> to vector<8x1xf32>
    %cst_43 = arith.constant dense<0.000000e+00> : vector<8x4xf32>
    %92 = tpu.matmul %89, %81, %cst_43 {dimension_numbers = #tpu.dot_dimension_numbers<[1], [0], [0], [1], [0, 0, 1, 1], [], []>} : vector<8x8xf32>, vector<8x4xf32>, vector<8x4xf32> -> vector<8x4xf32>
    %93 = tpu.reciprocal %91 : vector<8x1xf32> -> vector<8x1xf32>
    %94 = vector.broadcast %93 : vector<8x1xf32> to vector<8x4xf32>
    %95 = arith.mulf %92, %94 : vector<8x4xf32>
    %96 = vector.extract_strided_slice %12 {offsets = [0, 16], sizes = [8, 4], strides = [1, 1]} : vector<8x32xf32> to vector<8x4xf32>
    %97 = vector.extract_strided_slice %17 {offsets = [0, 16], sizes = [8, 4], strides = [1, 1]} : vector<8x32xf32> to vector<8x4xf32>
    %98 = vector.extract_strided_slice %22 {offsets = [0, 16], sizes = [8, 4], strides = [1, 1]} : vector<8x32xf32> to vector<8x4xf32>
    %cst_44 = arith.constant dense<0.000000e+00> : vector<8x8xf32>
    %99 = tpu.matmul %96, %97, %cst_44 {dimension_numbers = #tpu.dot_dimension_numbers<[1], [1], [0], [0], [0, 0, 1, 0], [], []>} : vector<8x4xf32>, vector<8x4xf32>, vector<8x8xf32> -> vector<8x8xf32>
    %100 = vector.broadcast %27 : vector<1x8xf32> to vector<8x8xf32>
    %101 = arith.subf %99, %100 : vector<8x8xf32>
    %cst_45 = arith.constant dense<0xFF800000> : vector<8xf32>
    %102 = vector.multi_reduction <maximumf>, %101, %cst_45 [1] : vector<8x8xf32> to vector<8xf32>
    %103 = vector.shape_cast %102 : vector<8xf32> to vector<8x1xf32>
    %104 = vector.broadcast %103 : vector<8x1xf32> to vector<8x8xf32>
    %105 = arith.subf %101, %104 : vector<8x8xf32>
    %106 = math.exp %105 : vector<8x8xf32>
    %cst_46 = arith.constant dense<0.000000e+00> : vector<8xf32>
    %107 = vector.multi_reduction <add>, %106, %cst_46 [1] : vector<8x8xf32> to vector<8xf32>
    %108 = vector.shape_cast %107 : vector<8xf32> to vector<8x1xf32>
    %cst_47 = arith.constant dense<0.000000e+00> : vector<8x4xf32>
    %109 = tpu.matmul %106, %98, %cst_47 {dimension_numbers = #tpu.dot_dimension_numbers<[1], [0], [0], [1], [0, 0, 1, 1], [], []>} : vector<8x8xf32>, vector<8x4xf32>, vector<8x4xf32> -> vector<8x4xf32>
    %110 = tpu.reciprocal %108 : vector<8x1xf32> -> vector<8x1xf32>
    %111 = vector.broadcast %110 : vector<8x1xf32> to vector<8x4xf32>
    %112 = arith.mulf %109, %111 : vector<8x4xf32>
    %113 = vector.extract_strided_slice %12 {offsets = [0, 20], sizes = [8, 4], strides = [1, 1]} : vector<8x32xf32> to vector<8x4xf32>
    %114 = vector.extract_strided_slice %17 {offsets = [0, 20], sizes = [8, 4], strides = [1, 1]} : vector<8x32xf32> to vector<8x4xf32>
    %115 = vector.extract_strided_slice %22 {offsets = [0, 20], sizes = [8, 4], strides = [1, 1]} : vector<8x32xf32> to vector<8x4xf32>
    %cst_48 = arith.constant dense<0.000000e+00> : vector<8x8xf32>
    %116 = tpu.matmul %113, %114, %cst_48 {dimension_numbers = #tpu.dot_dimension_numbers<[1], [1], [0], [0], [0, 0, 1, 0], [], []>} : vector<8x4xf32>, vector<8x4xf32>, vector<8x8xf32> -> vector<8x8xf32>
    %117 = vector.broadcast %27 : vector<1x8xf32> to vector<8x8xf32>
    %118 = arith.subf %116, %117 : vector<8x8xf32>
    %cst_49 = arith.constant dense<0xFF800000> : vector<8xf32>
    %119 = vector.multi_reduction <maximumf>, %118, %cst_49 [1] : vector<8x8xf32> to vector<8xf32>
    %120 = vector.shape_cast %119 : vector<8xf32> to vector<8x1xf32>
    %121 = vector.broadcast %120 : vector<8x1xf32> to vector<8x8xf32>
    %122 = arith.subf %118, %121 : vector<8x8xf32>
    %123 = math.exp %122 : vector<8x8xf32>
    %cst_50 = arith.constant dense<0.000000e+00> : vector<8xf32>
    %124 = vector.multi_reduction <add>, %123, %cst_50 [1] : vector<8x8xf32> to vector<8xf32>
    %125 = vector.shape_cast %124 : vector<8xf32> to vector<8x1xf32>
    %cst_51 = arith.constant dense<0.000000e+00> : vector<8x4xf32>
    %126 = tpu.matmul %123, %115, %cst_51 {dimension_numbers = #tpu.dot_dimension_numbers<[1], [0], [0], [1], [0, 0, 1, 1], [], []>} : vector<8x8xf32>, vector<8x4xf32>, vector<8x4xf32> -> vector<8x4xf32>
    %127 = tpu.reciprocal %125 : vector<8x1xf32> -> vector<8x1xf32>
    %128 = vector.broadcast %127 : vector<8x1xf32> to vector<8x4xf32>
    %129 = arith.mulf %126, %128 : vector<8x4xf32>
    %130 = vector.extract_strided_slice %12 {offsets = [0, 24], sizes = [8, 4], strides = [1, 1]} : vector<8x32xf32> to vector<8x4xf32>
    %131 = vector.extract_strided_slice %17 {offsets = [0, 24], sizes = [8, 4], strides = [1, 1]} : vector<8x32xf32> to vector<8x4xf32>
    %132 = vector.extract_strided_slice %22 {offsets = [0, 24], sizes = [8, 4], strides = [1, 1]} : vector<8x32xf32> to vector<8x4xf32>
    %cst_52 = arith.constant dense<0.000000e+00> : vector<8x8xf32>
    %133 = tpu.matmul %130, %131, %cst_52 {dimension_numbers = #tpu.dot_dimension_numbers<[1], [1], [0], [0], [0, 0, 1, 0], [], []>} : vector<8x4xf32>, vector<8x4xf32>, vector<8x8xf32> -> vector<8x8xf32>
    %134 = vector.broadcast %27 : vector<1x8xf32> to vector<8x8xf32>
    %135 = arith.subf %133, %134 : vector<8x8xf32>
    %cst_53 = arith.constant dense<0xFF800000> : vector<8xf32>
    %136 = vector.multi_reduction <maximumf>, %135, %cst_53 [1] : vector<8x8xf32> to vector<8xf32>
    %137 = vector.shape_cast %136 : vector<8xf32> to vector<8x1xf32>
    %138 = vector.broadcast %137 : vector<8x1xf32> to vector<8x8xf32>
    %139 = arith.subf %135, %138 : vector<8x8xf32>
    %140 = math.exp %139 : vector<8x8xf32>
    %cst_54 = arith.constant dense<0.000000e+00> : vector<8xf32>
    %141 = vector.multi_reduction <add>, %140, %cst_54 [1] : vector<8x8xf32> to vector<8xf32>
    %142 = vector.shape_cast %141 : vector<8xf32> to vector<8x1xf32>
    %cst_55 = arith.constant dense<0.000000e+00> : vector<8x4xf32>
    %143 = tpu.matmul %140, %132, %cst_55 {dimension_numbers = #tpu.dot_dimension_numbers<[1], [0], [0], [1], [0, 0, 1, 1], [], []>} : vector<8x8xf32>, vector<8x4xf32>, vector<8x4xf32> -> vector<8x4xf32>
    %144 = tpu.reciprocal %142 : vector<8x1xf32> -> vector<8x1xf32>
    %145 = vector.broadcast %144 : vector<8x1xf32> to vector<8x4xf32>
    %146 = arith.mulf %143, %145 : vector<8x4xf32>
    %147 = vector.extract_strided_slice %12 {offsets = [0, 28], sizes = [8, 4], strides = [1, 1]} : vector<8x32xf32> to vector<8x4xf32>
    %148 = vector.extract_strided_slice %17 {offsets = [0, 28], sizes = [8, 4], strides = [1, 1]} : vector<8x32xf32> to vector<8x4xf32>
    %149 = vector.extract_strided_slice %22 {offsets = [0, 28], sizes = [8, 4], strides = [1, 1]} : vector<8x32xf32> to vector<8x4xf32>
    %cst_56 = arith.constant dense<0.000000e+00> : vector<8x8xf32>
    %150 = tpu.matmul %147, %148, %cst_56 {dimension_numbers = #tpu.dot_dimension_numbers<[1], [1], [0], [0], [0, 0, 1, 0], [], []>} : vector<8x4xf32>, vector<8x4xf32>, vector<8x8xf32> -> vector<8x8xf32>
    %151 = vector.broadcast %27 : vector<1x8xf32> to vector<8x8xf32>
    %152 = arith.subf %150, %151 : vector<8x8xf32>
    %cst_57 = arith.constant dense<0xFF800000> : vector<8xf32>
    %153 = vector.multi_reduction <maximumf>, %152, %cst_57 [1] : vector<8x8xf32> to vector<8xf32>
    %154 = vector.shape_cast %153 : vector<8xf32> to vector<8x1xf32>
    %155 = vector.broadcast %154 : vector<8x1xf32> to vector<8x8xf32>
    %156 = arith.subf %152, %155 : vector<8x8xf32>
    %157 = math.exp %156 : vector<8x8xf32>
    %cst_58 = arith.constant dense<0.000000e+00> : vector<8xf32>
    %158 = vector.multi_reduction <add>, %157, %cst_58 [1] : vector<8x8xf32> to vector<8xf32>
    %159 = vector.shape_cast %158 : vector<8xf32> to vector<8x1xf32>
    %cst_59 = arith.constant dense<0.000000e+00> : vector<8x4xf32>
    %160 = tpu.matmul %157, %149, %cst_59 {dimension_numbers = #tpu.dot_dimension_numbers<[1], [0], [0], [1], [0, 0, 1, 1], [], []>} : vector<8x8xf32>, vector<8x4xf32>, vector<8x4xf32> -> vector<8x4xf32>
    %161 = tpu.reciprocal %159 : vector<8x1xf32> -> vector<8x1xf32>
    %162 = vector.broadcast %161 : vector<8x1xf32> to vector<8x4xf32>
    %163 = arith.mulf %160, %162 : vector<8x4xf32>
    %164 = tpu.concatenate %44, %61, %78, %95, %112, %129, %146, %163 in 1 : vector<8x4xf32>, vector<8x4xf32>, vector<8x4xf32>, vector<8x4xf32>, vector<8x4xf32>, vector<8x4xf32>, vector<8x4xf32>, vector<8x4xf32> -> vector<8x32xf32>
    %c0_60 = arith.constant 0 : index
    %c0_61 = arith.constant 0 : index
    %165 = vector.load %arg11[%c0_60, %c0_61] : memref<32x32xf32, #tpu.memory_space<vmem>>, vector<32x32xf32>
    %cst_62 = arith.constant dense<0.000000e+00> : vector<8x32xf32>
    %166 = tpu.matmul %164, %165, %cst_62 {dimension_numbers = #tpu.dot_dimension_numbers<[1], [0], [0], [1], [0, 0, 1, 1], [], []>} : vector<8x32xf32>, vector<32x32xf32>, vector<8x32xf32> -> vector<8x32xf32>
    %c0_63 = arith.constant 0 : index
    %c0_64 = arith.constant 0 : index
    %167 = vector.load %arg12[%c0_63, %c0_64] : memref<1x32xf32, #tpu.memory_space<vmem>>, vector<1x32xf32>
    %168 = vector.broadcast %167 : vector<1x32xf32> to vector<8x32xf32>
    %169 = arith.addf %166, %168 : vector<8x32xf32>
    %170 = arith.addf %169, %1 : vector<8x32xf32>
    %cst_65 = arith.constant dense<0.000000e+00> : vector<8xf32>
    %171 = vector.multi_reduction <add>, %170, %cst_65 [1] : vector<8x32xf32> to vector<8xf32>
    %172 = vector.shape_cast %171 : vector<8xf32> to vector<8x1xf32>
    %cst_66 = arith.constant 3.200000e+01 : f32
    %173 = vector.broadcast %cst_66 : f32 to vector<8x1xf32>
    %174 = arith.divf %172, %173 : vector<8x1xf32>
    %175 = vector.broadcast %174 : vector<8x1xf32> to vector<8x32xf32>
    %176 = arith.subf %170, %175 : vector<8x32xf32>
    %177 = arith.mulf %176, %176 : vector<8x32xf32>
    %cst_67 = arith.constant dense<0.000000e+00> : vector<8xf32>
    %178 = vector.multi_reduction <add>, %177, %cst_67 [1] : vector<8x32xf32> to vector<8xf32>
    %179 = vector.shape_cast %178 : vector<8xf32> to vector<8x1xf32>
    %cst_68 = arith.constant 3.200000e+01 : f32
    %180 = vector.broadcast %cst_68 : f32 to vector<8x1xf32>
    %181 = arith.divf %179, %180 : vector<8x1xf32>
    %182 = vector.broadcast %174 : vector<8x1xf32> to vector<8x32xf32>
    %183 = arith.subf %170, %182 : vector<8x32xf32>
    %cst_69 = arith.constant 9.99999974E-6 : f32
    %184 = vector.broadcast %cst_69 : f32 to vector<8x1xf32>
    %185 = arith.addf %181, %184 : vector<8x1xf32>
    %186 = math.rsqrt %185 : vector<8x1xf32>
    %187 = vector.broadcast %186 : vector<8x1xf32> to vector<8x32xf32>
    %188 = arith.mulf %183, %187 : vector<8x32xf32>
    %c0_70 = arith.constant 0 : index
    %c0_71 = arith.constant 0 : index
    %189 = vector.load %arg13[%c0_70, %c0_71] : memref<1x32xf32, #tpu.memory_space<vmem>>, vector<1x32xf32>
    %190 = vector.broadcast %189 : vector<1x32xf32> to vector<8x32xf32>
    %191 = arith.mulf %188, %190 : vector<8x32xf32>
    %c0_72 = arith.constant 0 : index
    %c0_73 = arith.constant 0 : index
    %192 = vector.load %arg14[%c0_72, %c0_73] : memref<1x32xf32, #tpu.memory_space<vmem>>, vector<1x32xf32>
    %193 = vector.broadcast %192 : vector<1x32xf32> to vector<8x32xf32>
    %194 = arith.addf %191, %193 : vector<8x32xf32>
    %c0_74 = arith.constant 0 : index
    %c0_75 = arith.constant 0 : index
    %c0_76 = arith.constant 0 : index
    %195 = vector.load %arg16[%c0_74, %c0_75, %c0_76] : memref<1x8x32xf32, #tpu.memory_space<vmem>>, vector<1x8x32xf32>
    %196 = vector.shape_cast %195 : vector<1x8x32xf32> to vector<8x32xf32>
    %197 = vector.shape_cast %194 : vector<8x32xf32> to vector<1x8x32xf32>
    tpu.vector_store %arg16[%c0_74, %c0_75, %c0_76], %197 {strides = array<i32>} : memref<1x8x32xf32, #tpu.memory_space<vmem>>, vector<1x8x32xf32>,
    return
  }
  func.func @transform_0(%arg0: i32) -> (i32, i32, i32) {
    %c0_i32 = arith.constant 0 : i32
    %c0_i32_0 = arith.constant 0 : i32
    %c0_i32_1 = arith.constant 0 : i32
    return %arg0, %c0_i32, %c0_i32_0 : i32, i32, i32
  }
  func.func @transform_1(%arg0: i32) -> (i32, i32, i32) {
    %c0_i32 = arith.constant 0 : i32
    %c0_i32_0 = arith.constant 0 : i32
    %c0_i32_1 = arith.constant 0 : i32
    return %arg0, %c0_i32, %c0_i32_0 : i32, i32, i32
  }
  func.func @transform_2(%arg0: i32) -> (i32, i32, i32) {
    %c0_i32 = arith.constant 0 : i32
    %c0_i32_0 = arith.constant 0 : i32
    %c0_i32_1 = arith.constant 0 : i32
    return %arg0, %c0_i32, %c0_i32_0 : i32, i32, i32
  }
  func.func @transform_3(%arg0: i32) -> (i32, i32, i32) {
    %c0_i32 = arith.constant 0 : i32
    %c0_i32_0 = arith.constant 0 : i32
    %c0_i32_1 = arith.constant 0 : i32
    return %arg0, %c0_i32, %c0_i32_0 : i32, i32, i32
  }
  func.func @transform_4(%arg0: i32) -> (i32, i32) {
    %c0_i32 = arith.constant 0 : i32
    %c0_i32_0 = arith.constant 0 : i32
    %c0_i32_1 = arith.constant 0 : i32
    return %c0_i32, %c0_i32_0 : i32, i32
  }
  func.func @transform_5(%arg0: i32) -> (i32, i32) {
    %c0_i32 = arith.constant 0 : i32
    %c0_i32_0 = arith.constant 0 : i32
    %c0_i32_1 = arith.constant 0 : i32
    return %c0_i32, %c0_i32_0 : i32, i32
  }
  func.func @transform_6(%arg0: i32) -> (i32, i32) {
    %c0_i32 = arith.constant 0 : i32
    %c0_i32_0 = arith.constant 0 : i32
    %c0_i32_1 = arith.constant 0 : i32
    return %c0_i32, %c0_i32_0 : i32, i32
  }
  func.func @transform_7(%arg0: i32) -> (i32, i32) {
    %c0_i32 = arith.constant 0 : i32
    %c0_i32_0 = arith.constant 0 : i32
    %c0_i32_1 = arith.constant 0 : i32
    return %c0_i32, %c0_i32_0 : i32, i32
  }
  func.func @transform_8(%arg0: i32) -> (i32, i32) {
    %c0_i32 = arith.constant 0 : i32
    %c0_i32_0 = arith.constant 0 : i32
    %c0_i32_1 = arith.constant 0 : i32
    return %c0_i32, %c0_i32_0 : i32, i32
  }
  func.func @transform_9(%arg0: i32) -> (i32, i32) {
    %c0_i32 = arith.constant 0 : i32
    %c0_i32_0 = arith.constant 0 : i32
    %c0_i32_1 = arith.constant 0 : i32
    return %c0_i32, %c0_i32_0 : i32, i32
  }
  func.func @transform_10(%arg0: i32) -> (i32, i32) {
    %c0_i32 = arith.constant 0 : i32
    %c0_i32_0 = arith.constant 0 : i32
    %c0_i32_1 = arith.constant 0 : i32
    return %c0_i32, %c0_i32_0 : i32, i32
  }
  func.func @transform_11(%arg0: i32) -> (i32, i32) {
    %c0_i32 = arith.constant 0 : i32
    %c0_i32_0 = arith.constant 0 : i32
    %c0_i32_1 = arith.constant 0 : i32
    return %c0_i32, %c0_i32_0 : i32, i32
  }
  func.func @transform_12(%arg0: i32) -> (i32, i32) {
    %c0_i32 = arith.constant 0 : i32
    %c0_i32_0 = arith.constant 0 : i32
    %c0_i32_1 = arith.constant 0 : i32
    return %c0_i32, %c0_i32_0 : i32, i32
  }
  func.func @transform_13(%arg0: i32) -> (i32, i32) {
    %c0_i32 = arith.constant 0 : i32
    %c0_i32_0 = arith.constant 0 : i32
    %c0_i32_1 = arith.constant 0 : i32
    return %c0_i32, %c0_i32_0 : i32, i32
  }
  func.func @transform_14(%arg0: i32) -> (i32, i32) {
    %c0_i32 = arith.constant 0 : i32
    %c0_i32_0 = arith.constant 0 : i32
    %c0_i32_1 = arith.constant 0 : i32
    return %c0_i32, %c0_i32_0 : i32, i32
  }
  func.func @transform_15(%arg0: i32) -> (i32, i32, i32) {
    %c0_i32 = arith.constant 0 : i32
    %c0_i32_0 = arith.constant 0 : i32
    %c0_i32_1 = arith.constant 0 : i32
    return %arg0, %c0_i32, %c0_i32_0 : i32, i32, i32
  }
}

</mosaic_0001>

<llo_original>
// kernel: tpu_custom_call.1
$region0: #{tpu_custom_call.1}
  #allocation0 [shape = 'u32[]', space=smem, size = 0x4, offset = 0x4, fixed_abs, tag = 'smem constant byte address 0x4 - core index']
  #allocation1 [shape = 'u32[144,128]{1,0:T(1,128)}', space=vmem, size = 0x12000, scoped, tag = 'internal scratch']
  #allocation2 [shape = 'f32[1,1]{1,0:T(1,128)S(6)}', space=smem, size = 0x200, scoped, tag = 'scoped memory for tpu_custom_call.1']
  %s0 = inlined_call_operand.hbm [shape: f32[2,8,32], index: 0, kind: input, shape index: {}]
  %s1 = inlined_call_operand.hbm [shape: f32[2,8,32], index: 1, kind: input, shape index: {}]
  %s2 = inlined_call_operand.hbm [shape: f32[2,8,32], index: 2, kind: input, shape index: {}]
  %s3 = inlined_call_operand.vmem [shape: f32[2,1,8], index: 3, kind: input, shape index: {}]
  %s4 = inlined_call_operand.hbm [shape: f32[32,32], index: 4, kind: input, shape index: {}]
  %s5 = inlined_call_operand.vmem [shape: f32[1,32], index: 5, kind: input, shape index: {}]
  %s6 = inlined_call_operand.hbm [shape: f32[32,32], index: 6, kind: input, shape index: {}]
  %s7 = inlined_call_operand.vmem [shape: f32[1,32], index: 7, kind: input, shape index: {}]
  %s8 = inlined_call_operand.hbm [shape: f32[32,32], index: 8, kind: input, shape index: {}]
  %s9 = inlined_call_operand.vmem [shape: f32[1,32], index: 9, kind: input, shape index: {}]
  %s10 = inlined_call_operand.hbm [shape: f32[32,32], index: 10, kind: input, shape index: {}]
  %s11 = inlined_call_operand.vmem [shape: f32[1,32], index: 11, kind: input, shape index: {}]
  %s12 = inlined_call_operand.vmem [shape: f32[1,32], index: 12, kind: input, shape index: {}]
  %s13 = inlined_call_operand.vmem [shape: f32[1,32], index: 13, kind: input, shape index: {}]
  %s14 = inlined_call_operand.<no memory space> [shape: f32[1,1], index: 14, kind: input, shape index: {}]
  %s15 = inlined_call_operand.hbm [shape: f32[2,8,32], index: 15, kind: output, shape index: {}]
  %s16 = sld [smem:[#allocation0]]
  $region121: #{tpu_custom_call.1} parent=0
    _
  %s18 = ssub.s32 1, %s16
  %s19 = scalar_select 0, %s18, %s16
  %20 = sst [smem:[#allocation2]] %s14
  $region1: #{tpu_custom_call.1} parent=0
    #allocation3 [shape = 'u8[8192]{0}', space=vmem, size = 0x2000, scoped, tag = 'input window, operand 0']
    #allocation4 [shape = 's32[2]{0}', space=sflag, size = 0x8, scoped, tag = 'scoped memory for tpu_custom_call.1']
    #allocation5 [shape = 's32[2]{0}', space=sflag, size = 0x8, scoped, tag = 'scoped memory for tpu_custom_call.1']
    #allocation6 [shape = 'u8[8192]{0}', space=vmem, size = 0x2000, scoped, tag = 'input window, operand 1']
    #allocation7 [shape = 's32[2]{0}', space=sflag, size = 0x8, scoped, tag = 'scoped memory for tpu_custom_call.1']
    #allocation8 [shape = 'u8[8192]{0}', space=vmem, size = 0x2000, scoped, tag = 'input window, operand 2']
    #allocation9 [shape = 'u8[16384]{0}', space=vmem, size = 0x4000, scoped, tag = 'input window, operand 4, single buffered']
    #allocation10 [shape = 's32[1]{0}', space=sflag, size = 0x4, scoped, tag = 'scoped memory for tpu_custom_call.1']
    #allocation11 [shape = 'u8[16384]{0}', space=vmem, size = 0x4000, scoped, tag = 'input window, operand 6, single buffered']
    #allocation12 [shape = 'u8[16384]{0}', space=vmem, size = 0x4000, scoped, tag = 'input window, operand 8, single buffered']
    #allocation13 [shape = 's32[1]{0}', space=sflag, size = 0x4, scoped, tag = 'scoped memory for tpu_custom_call.1']
    #allocation14 [shape = 'u8[16384]{0}', space=vmem, size = 0x4000, scoped, tag = 'input window, operand 10, single buffered']
    #allocation15 [shape = 'u8[8192]{0}', space=vmem, size = 0x2000, scoped, tag = 'output window, operand 0']
    %21 = vsyncpa [#allocation4], 0
    %s22 = scalar_lea.sflag [#allocation4], 1
    %23 = vsyncpa %s22, 0
    %24 = vsyncpa [#allocation7], 0
    %s25 = scalar_lea.sflag [#allocation7], 1
    %26 = vsyncpa %s25, 0
    %27 = vsyncpa [#allocation10], 0
    %28 = vsyncpa [#allocation13], 0
    %29 = vsyncpa [#allocation5], 0
    %s30 = scalar_lea.sflag [#allocation5], 1
    %31 = vsyncpa %s30, 0
    loop: start=0, step=1, limit=4
    $region2: #{tpu_custom_call.1} parent=1 // loop_pre_header
      _
    $region3: #{tpu_custom_call.1} parent=1 // loop_header
      %s33 = sphi 0, %s37
      %p34 = scmp.ge.s32.totalorder %s33, 4
      %s43 = sphi 0, %s45
      %s46 = sphi 0, %s43
      %s47 = sphi 0, %s46
      %s63 = sphi 0, %s47
      %s69 = sphi 0, %s71
      %s72 = sphi 0, %s69
      %s73 = sphi 0, %s72
      %s89 = sphi 0, %s73
      %s95 = sphi 0, %s97
      %s98 = sphi 0, %s95
      %s99 = sphi 0, %s98
      %s115 = sphi 0, %s99
      %s121 = sphi 0, %s123
      %s124 = sphi 0, %s121
      %s125 = sphi 0, %s124
      %s141 = sphi 0, %s125
      %s145 = sphi 0, %s145
      %s147 = sphi 0, %s145
      %s148 = sphi 0, %s147
      %s162 = sphi 0, %s148
      %s166 = sphi 0, %s166
      %s168 = sphi 0, %s166
      %s169 = sphi 0, %s168
      %s183 = sphi 0, %s169
      %s187 = sphi 0, %s187
      %s189 = sphi 0, %s187
      %s190 = sphi 0, %s189
      %s204 = sphi 0, %s190
      %s208 = sphi 0, %s208
      %s210 = sphi 0, %s208
      %s211 = sphi 0, %s210
      %s225 = sphi 0, %s211
      %s229 = sphi 0, %s229
      %s231 = sphi 0, %s229
      %s232 = sphi 0, %s231
      %s246 = sphi 0, %s232
      %s250 = sphi 0, %s250
      %s252 = sphi 0, %s250
      %s253 = sphi 0, %s252
      %s267 = sphi 0, %s253
      %s271 = sphi 0, %s271
      %s273 = sphi 0, %s271
      %s274 = sphi 0, %s273
      %s288 = sphi 0, %s274
      %s292 = sphi 0, %s292
      %s294 = sphi 0, %s292
      %s295 = sphi 0, %s294
      %s309 = sphi 0, %s295
      %s313 = sphi 0, %s313
      %s315 = sphi 0, %s313
      %s316 = sphi 0, %s315
      %s330 = sphi 0, %s316
      %s334 = sphi 0, %s334
      %s336 = sphi 0, %s334
      %s337 = sphi 0, %s336
      %s351 = sphi 0, %s337
      %s355 = sphi 0, %s355
      %s357 = sphi 0, %s355
      %s358 = sphi 0, %s357
      %s372 = sphi 0, %s358
      %s378 = sphi 0, %s380
      %s381 = sphi 0, %s378
      %s382 = sphi 0, %s381
      %s398 = sphi 0, %s382
    $region4: #{tpu_custom_call.1} parent=1 // loop_header_branch
      %36 = sbr.rel (%p34) target = $region8
    $region5: #{tpu_custom_call.1} parent=1 // loop_body
      %s38 = ssub.s32 %s33, 1
      %s39 = ssub.s32 %s33, 2
      %s40 = sadd.s32 %s33, 1
      %s41 = ssub.s32 %s33, %s40
      %p42 = scmp.eq.s32.totalorder %s41, 0
      %s44 = sadd.s32 %s43, 1
      %s45 = scalar_select %p42, %s43, %s44
      %p48 = pneg %p42
      %p49 = scmp.eq.s32.totalorder %s33, 1
      %p50 = por %p48, %p49
      %p51 = scmp.ne.s32.totalorder %s43, %s46
      %p52 = scmp.eq.s32.totalorder %s33, 0
      %p53 = por %p51, %p52
      %p54 = scmp.ne.s32.totalorder %s43, %s46
      %p55 = scmp.eq.s32.totalorder %s38, 1
      %p56 = por %p54, %p55
      %p57 = scmp.ne.s32.totalorder %s46, %s47
      %p58 = scmp.eq.s32.totalorder %s38, 0
      %p59 = por %p57, %p58
      %p60 = scmp.ne.s32.totalorder %s46, %s47
      %p61 = scmp.eq.s32.totalorder %s39, 1
      %p62 = por %p60, %p61
      %p64 = scmp.ne.s32.totalorder %s47, %s63
      %p65 = scmp.eq.s32.totalorder %s39, 0
      %p66 = por %p64, %p65
      %s67 = ssub.s32 %s33, %s40
      %p68 = scmp.eq.s32.totalorder %s67, 0
      %s70 = sadd.s32 %s69, 1
      %s71 = scalar_select %p68, %s69, %s70
      %p74 = pneg %p68
      %p75 = scmp.eq.s32.totalorder %s33, 1
      %p76 = por %p74, %p75
      %p77 = scmp.ne.s32.totalorder %s69, %s72
      %p78 = scmp.eq.s32.totalorder %s33, 0
      %p79 = por %p77, %p78
      %p80 = scmp.ne.s32.totalorder %s69, %s72
      %p81 = scmp.eq.s32.totalorder %s38, 1
      %p82 = por %p80, %p81
      %p83 = scmp.ne.s32.totalorder %s72, %s73
      %p84 = scmp.eq.s32.totalorder %s38, 0
      %p85 = por %p83, %p84
      %p86 = scmp.ne.s32.totalorder %s72, %s73
      %p87 = scmp.eq.s32.totalorder %s39, 1
      %p88 = por %p86, %p87
      %p90 = scmp.ne.s32.totalorder %s73, %s89
      %p91 = scmp.eq.s32.totalorder %s39, 0
      %p92 = por %p90, %p91
      %s93 = ssub.s32 %s33, %s40
      %p94 = scmp.eq.s32.totalorder %s93, 0
      %s96 = sadd.s32 %s95, 1
      %s97 = scalar_select %p94, %s95, %s96
      %p100 = pneg %p94
      %p101 = scmp.eq.s32.totalorder %s33, 1
      %p102 = por %p100, %p101
      %p103 = scmp.ne.s32.totalorder %s95, %s98
      %p104 = scmp.eq.s32.totalorder %s33, 0
      %p105 = por %p103, %p104
      %p106 = scmp.ne.s32.totalorder %s95, %s98
      %p107 = scmp.eq.s32.totalorder %s38, 1
      %p108 = por %p106, %p107
      %p109 = scmp.ne.s32.totalorder %s98, %s99
      %p110 = scmp.eq.s32.totalorder %s38, 0
      %p111 = por %p109, %p110
      %p112 = scmp.ne.s32.totalorder %s98, %s99
      %p113 = scmp.eq.s32.totalorder %s39, 1
      %p114 = por %p112, %p113
      %p116 = scmp.ne.s32.totalorder %s99, %s115
      %p117 = scmp.eq.s32.totalorder %s39, 0
      %p118 = por %p116, %p117
      %s119 = ssub.s32 %s33, %s40
      %p120 = scmp.eq.s32.totalorder %s119, 0
      %s122 = sadd.s32 %s121, 1
      %s123 = scalar_select %p120, %s121, %s122
      %p126 = pneg %p120
      %p127 = scmp.eq.s32.totalorder %s33, 1
      %p128 = por %p126, %p127
      %p129 = scmp.ne.s32.totalorder %s121, %s124
      %p130 = scmp.eq.s32.totalorder %s33, 0
      %p131 = por %p129, %p130
      %p132 = scmp.ne.s32.totalorder %s121, %s124
      %p133 = scmp.eq.s32.totalorder %s38, 1
      %p134 = por %p132, %p133
      %p135 = scmp.ne.s32.totalorder %s124, %s125
      %p136 = scmp.eq.s32.totalorder %s38, 0
      %p137 = por %p135, %p136
      %p138 = scmp.ne.s32.totalorder %s124, %s125
      %p139 = scmp.eq.s32.totalorder %s39, 1
      %p140 = por %p138, %p139
      %p142 = scmp.ne.s32.totalorder %s125, %s141
      %p143 = scmp.eq.s32.totalorder %s39, 0
      %p144 = por %p142, %p143
      %s146 = sadd.s32 %s145, 1
      %p149 = scmp.eq.s32.totalorder %s33, 1
      %p150 = scmp.ne.s32.totalorder %s145, %s147
      %p151 = scmp.eq.s32.totalorder %s33, 0
      %p152 = por %p150, %p151
      %p153 = scmp.ne.s32.totalorder %s145, %s147
      %p154 = scmp.eq.s32.totalorder %s38, 1
      %p155 = por %p153, %p154
      %p156 = scmp.ne.s32.totalorder %s147, %s148
      %p157 = scmp.eq.s32.totalorder %s38, 0
      %p158 = por %p156, %p157
      %p159 = scmp.ne.s32.totalorder %s147, %s148
      %p160 = scmp.eq.s32.totalorder %s39, 1
      %p161 = por %p159, %p160
      %p163 = scmp.ne.s32.totalorder %s148, %s162
      %p164 = scmp.eq.s32.totalorder %s39, 0
      %p165 = por %p163, %p164
      %s167 = sadd.s32 %s166, 1
      %p170 = scmp.eq.s32.totalorder %s33, 1
      %p171 = scmp.ne.s32.totalorder %s166, %s168
      %p172 = scmp.eq.s32.totalorder %s33, 0
      %p173 = por %p171, %p172
      %p174 = scmp.ne.s32.totalorder %s166, %s168
      %p175 = scmp.eq.s32.totalorder %s38, 1
      %p176 = por %p174, %p175
      %p177 = scmp.ne.s32.totalorder %s168, %s169
      %p178 = scmp.eq.s32.totalorder %s38, 0
      %p179 = por %p177, %p178
      %p180 = scmp.ne.s32.totalorder %s168, %s169
      %p181 = scmp.eq.s32.totalorder %s39, 1
      %p182 = por %p180, %p181
      %p184 = scmp.ne.s32.totalorder %s169, %s183
      %p185 = scmp.eq.s32.totalorder %s39, 0
      %p186 = por %p184, %p185
      %s188 = sadd.s32 %s187, 1
      %p191 = scmp.eq.s32.totalorder %s33, 1
      %p192 = scmp.ne.s32.totalorder %s187, %s189
      %p193 = scmp.eq.s32.totalorder %s33, 0
      %p194 = por %p192, %p193
      %p195 = scmp.ne.s32.totalorder %s187, %s189
      %p196 = scmp.eq.s32.totalorder %s38, 1
      %p197 = por %p195, %p196
      %p198 = scmp.ne.s32.totalorder %s189, %s190
      %p199 = scmp.eq.s32.totalorder %s38, 0
      %p200 = por %p198, %p199
      %p201 = scmp.ne.s32.totalorder %s189, %s190
      %p202 = scmp.eq.s32.totalorder %s39, 1
      %p203 = por %p201, %p202
      %p205 = scmp.ne.s32.totalorder %s190, %s204
      %p206 = scmp.eq.s32.totalorder %s39, 0
      %p207 = por %p205, %p206
      %s209 = sadd.s32 %s208, 1
      %p212 = scmp.eq.s32.totalorder %s33, 1
      %p213 = scmp.ne.s32.totalorder %s208, %s210
      %p214 = scmp.eq.s32.totalorder %s33, 0
      %p215 = por %p213, %p214
      %p216 = scmp.ne.s32.totalorder %s208, %s210
      %p217 = scmp.eq.s32.totalorder %s38, 1
      %p218 = por %p216, %p217
      %p219 = scmp.ne.s32.totalorder %s210, %s211
      %p220 = scmp.eq.s32.totalorder %s38, 0
      %p221 = por %p219, %p220
      %p222 = scmp.ne.s32.totalorder %s210, %s211
      %p223 = scmp.eq.s32.totalorder %s39, 1
      %p224 = por %p222, %p223
      %p226 = scmp.ne.s32.totalorder %s211, %s225
      %p227 = scmp.eq.s32.totalorder %s39, 0
      %p228 = por %p226, %p227
      %s230 = sadd.s32 %s229, 1
      %p233 = scmp.eq.s32.totalorder %s33, 1
      %p234 = scmp.ne.s32.totalorder %s229, %s231
      %p235 = scmp.eq.s32.totalorder %s33, 0
      %p236 = por %p234, %p235
      %p237 = scmp.ne.s32.totalorder %s229, %s231
      %p238 = scmp.eq.s32.totalorder %s38, 1
      %p239 = por %p237, %p238
      %p240 = scmp.ne.s32.totalorder %s231, %s232
      %p241 = scmp.eq.s32.totalorder %s38, 0
      %p242 = por %p240, %p241
      %p243 = scmp.ne.s32.totalorder %s231, %s232
      %p244 = scmp.eq.s32.totalorder %s39, 1
      %p245 = por %p243, %p244
      %p247 = scmp.ne.s32.totalorder %s232, %s246
      %p248 = scmp.eq.s32.totalorder %s39, 0
      %p249 = por %p247, %p248
      %s251 = sadd.s32 %s250, 1
      %p254 = scmp.eq.s32.totalorder %s33, 1
      %p255 = scmp.ne.s32.totalorder %s250, %s252
      %p256 = scmp.eq.s32.totalorder %s33, 0
      %p257 = por %p255, %p256
      %p258 = scmp.ne.s32.totalorder %s250, %s252
      %p259 = scmp.eq.s32.totalorder %s38, 1
      %p260 = por %p258, %p259
      %p261 = scmp.ne.s32.totalorder %s252, %s253
      %p262 = scmp.eq.s32.totalorder %s38, 0
      %p263 = por %p261, %p262
      %p264 = scmp.ne.s32.totalorder %s252, %s253
      %p265 = scmp.eq.s32.totalorder %s39, 1
      %p266 = por %p264, %p265
      %p268 = scmp.ne.s32.totalorder %s253, %s267
      %p269 = scmp.eq.s32.totalorder %s39, 0
      %p270 = por %p268, %p269
      %s272 = sadd.s32 %s271, 1
      %p275 = scmp.eq.s32.totalorder %s33, 1
      %p276 = scmp.ne.s32.totalorder %s271, %s273
      %p277 = scmp.eq.s32.totalorder %s33, 0
      %p278 = por %p276, %p277
      %p279 = scmp.ne.s32.totalorder %s271, %s273
      %p280 = scmp.eq.s32.totalorder %s38, 1
      %p281 = por %p279, %p280
      %p282 = scmp.ne.s32.totalorder %s273, %s274
      %p283 = scmp.eq.s32.totalorder %s38, 0
      %p284 = por %p282, %p283
      %p285 = scmp.ne.s32.totalorder %s273, %s274
      %p286 = scmp.eq.s32.totalorder %s39, 1
      %p287 = por %p285, %p286
      %p289 = scmp.ne.s32.totalorder %s274, %s288
      %p290 = scmp.eq.s32.totalorder %s39, 0
      %p291 = por %p289, %p290
      %s293 = sadd.s32 %s292, 1
      %p296 = scmp.eq.s32.totalorder %s33, 1
      %p297 = scmp.ne.s32.totalorder %s292, %s294
      %p298 = scmp.eq.s32.totalorder %s33, 0
      %p299 = por %p297, %p298
      %p300 = scmp.ne.s32.totalorder %s292, %s294
      %p301 = scmp.eq.s32.totalorder %s38, 1
      %p302 = por %p300, %p301
      %p303 = scmp.ne.s32.totalorder %s294, %s295
      %p304 = scmp.eq.s32.totalorder %s38, 0
      %p305 = por %p303, %p304
      %p306 = scmp.ne.s32.totalorder %s294, %s295
      %p307 = scmp.eq.s32.totalorder %s39, 1
      %p308 = por %p306, %p307
      %p310 = scmp.ne.s32.totalorder %s295, %s309
      %p311 = scmp.eq.s32.totalorder %s39, 0
      %p312 = por %p310, %p311
      %s314 = sadd.s32 %s313, 1
      %p317 = scmp.eq.s32.totalorder %s33, 1
      %p318 = scmp.ne.s32.totalorder %s313, %s315
      %p319 = scmp.eq.s32.totalorder %s33, 0
      %p320 = por %p318, %p319
      %p321 = scmp.ne.s32.totalorder %s313, %s315
      %p322 = scmp.eq.s32.totalorder %s38, 1
      %p323 = por %p321, %p322
      %p324 = scmp.ne.s32.totalorder %s315, %s316
      %p325 = scmp.eq.s32.totalorder %s38, 0
      %p326 = por %p324, %p325
      %p327 = scmp.ne.s32.totalorder %s315, %s316
      %p328 = scmp.eq.s32.totalorder %s39, 1
      %p329 = por %p327, %p328
      %p331 = scmp.ne.s32.totalorder %s316, %s330
      %p332 = scmp.eq.s32.totalorder %s39, 0
      %p333 = por %p331, %p332
      %s335 = sadd.s32 %s334, 1
      %p338 = scmp.eq.s32.totalorder %s33, 1
      %p339 = scmp.ne.s32.totalorder %s334, %s336
      %p340 = scmp.eq.s32.totalorder %s33, 0
      %p341 = por %p339, %p340
      %p342 = scmp.ne.s32.totalorder %s334, %s336
      %p343 = scmp.eq.s32.totalorder %s38, 1
      %p344 = por %p342, %p343
      %p345 = scmp.ne.s32.totalorder %s336, %s337
      %p346 = scmp.eq.s32.totalorder %s38, 0
      %p347 = por %p345, %p346
      %p348 = scmp.ne.s32.totalorder %s336, %s337
      %p349 = scmp.eq.s32.totalorder %s39, 1
      %p350 = por %p348, %p349
      %p352 = scmp.ne.s32.totalorder %s337, %s351
      %p353 = scmp.eq.s32.totalorder %s39, 0
      %p354 = por %p352, %p353
      %s356 = sadd.s32 %s355, 1
      %p359 = scmp.eq.s32.totalorder %s33, 1
      %p360 = scmp.ne.s32.totalorder %s355, %s357
      %p361 = scmp.eq.s32.totalorder %s33, 0
      %p362 = por %p360, %p361
      %p363 = scmp.ne.s32.totalorder %s355, %s357
      %p364 = scmp.eq.s32.totalorder %s38, 1
      %p365 = por %p363, %p364
      %p366 = scmp.ne.s32.totalorder %s357, %s358
      %p367 = scmp.eq.s32.totalorder %s38, 0
      %p368 = por %p366, %p367
      %p369 = scmp.ne.s32.totalorder %s357, %s358
      %p370 = scmp.eq.s32.totalorder %s39, 1
      %p371 = por %p369, %p370
      %p373 = scmp.ne.s32.totalorder %s358, %s372
      %p374 = scmp.eq.s32.totalorder %s39, 0
      %p375 = por %p373, %p374
      %s376 = ssub.s32 %s33, %s40
      %p377 = scmp.eq.s32.totalorder %s376, 0
      %s379 = sadd.s32 %s378, 1
      %s380 = scalar_select %p377, %s378, %s379
      %p383 = pneg %p377
      %p384 = scmp.eq.s32.totalorder %s33, 1
      %p385 = por %p383, %p384
      %p386 = scmp.ne.s32.totalorder %s378, %s381
      %p387 = scmp.eq.s32.totalorder %s33, 0
      %p388 = por %p386, %p387
      %p389 = scmp.ne.s32.totalorder %s378, %s381
      %p390 = scmp.eq.s32.totalorder %s38, 1
      %p391 = por %p389, %p390
      %p392 = scmp.ne.s32.totalorder %s381, %s382
      %p393 = scmp.eq.s32.totalorder %s38, 0
      %p394 = por %p392, %p393
      %p395 = scmp.ne.s32.totalorder %s381, %s382
      %p396 = scmp.eq.s32.totalorder %s39, 1
      %p397 = por %p395, %p396
      %p399 = scmp.ne.s32.totalorder %s382, %s398
      %p400 = scmp.eq.s32.totalorder %s39, 0
      %p401 = por %p399, %p400
      %p402 = scmp.le.s32.totalorder 1, %s33
      %p403 = scmp.lt.s32.totalorder %s33, 3
      %p404 = pnand %p402, %p403
      %p405 = pneg %p404
      // Predicated region
      $region9: #{tpu_custom_call.1} parent=5 // pred_check
        _
      $region10: #{tpu_custom_call.1} parent=5 // pred_check_branch
        %407 = sbr.rel (%p404) target = $region12
      $region11: #{tpu_custom_call.1} parent=5 // pred_region
        %s408 = ssub.s32 %s33, 1
        // Predicated region
        $region13: #{tpu_custom_call.1} parent=11 // pred_check
          %p409 = pneg %p158
        $region14: #{tpu_custom_call.1} parent=11 // pred_check_branch
          %411 = sbr.rel (%p409) target = $region16
        $region15: #{tpu_custom_call.1} parent=11 // pred_region
          %s413 = ssub.s32 512, 512
          %414 = vsyncadd [#allocation10], %s413
          %s415 = sshll.u32 [#allocation9], 4
          %s416 = int_to_ptr.vmem [resolvable:$true] %s415
          %421 = dma.hbm_to_vmem [thread:$0]  %s4, 512, %s416, [#allocation10], 128, 128, 8
        $region16: #{tpu_custom_call.1} parent=11 // pred_fallthru
          _
        // Predicated region
        $region17: #{tpu_custom_call.1} parent=11 // pred_check
          %p422 = pneg %p179
        $region18: #{tpu_custom_call.1} parent=11 // pred_check_branch
          %424 = sbr.rel (%p422) target = $region20
        $region19: #{tpu_custom_call.1} parent=11 // pred_region
          _
        $region20: #{tpu_custom_call.1} parent=11 // pred_fallthru
          _
        // Predicated region
        $region21: #{tpu_custom_call.1} parent=11 // pred_check
          %p425 = pneg %p200
        $region22: #{tpu_custom_call.1} parent=11 // pred_check_branch
          %427 = sbr.rel (%p425) target = $region24
        $region23: #{tpu_custom_call.1} parent=11 // pred_region
          %s429 = ssub.s32 512, 512
          %430 = vsyncadd [#allocation10], %s429
          %s431 = sshll.u32 [#allocation11], 4
          %s432 = int_to_ptr.vmem [resolvable:$true] %s431
          %437 = dma.hbm_to_vmem [thread:$0]  %s6, 512, %s432, [#allocation10], 128, 128, 8
        $region24: #{tpu_custom_call.1} parent=11 // pred_fallthru
          _
        // Predicated region
        $region25: #{tpu_custom_call.1} parent=11 // pred_check
          %p438 = pneg %p221
        $region26: #{tpu_custom_call.1} parent=11 // pred_check_branch
          %440 = sbr.rel (%p438) target = $region28
        $region27: #{tpu_custom_call.1} parent=11 // pred_region
          _
        $region28: #{tpu_custom_call.1} parent=11 // pred_fallthru
          _
        // Predicated region
        $region29: #{tpu_custom_call.1} parent=11 // pred_check
          %p441 = pneg %p242
        $region30: #{tpu_custom_call.1} parent=11 // pred_check_branch
          %443 = sbr.rel (%p441) target = $region32
        $region31: #{tpu_custom_call.1} parent=11 // pred_region
          %s445 = ssub.s32 512, 512
          %446 = vsyncadd [#allocation13], %s445
          %s447 = sshll.u32 [#allocation12], 4
          %s448 = int_to_ptr.vmem [resolvable:$true] %s447
          %453 = dma.hbm_to_vmem [thread:$0]  %s8, 512, %s448, [#allocation13], 128, 128, 8
        $region32: #{tpu_custom_call.1} parent=11 // pred_fallthru
          _
        // Predicated region
        $region33: #{tpu_custom_call.1} parent=11 // pred_check
          %p454 = pneg %p263
        $region34: #{tpu_custom_call.1} parent=11 // pred_check_branch
          %456 = sbr.rel (%p454) target = $region36
        $region35: #{tpu_custom_call.1} parent=11 // pred_region
          _
        $region36: #{tpu_custom_call.1} parent=11 // pred_fallthru
          _
        // Predicated region
        $region37: #{tpu_custom_call.1} parent=11 // pred_check
          %p457 = pneg %p284
        $region38: #{tpu_custom_call.1} parent=11 // pred_check_branch
          %459 = sbr.rel (%p457) target = $region40
        $region39: #{tpu_custom_call.1} parent=11 // pred_region
          %s461 = ssub.s32 512, 512
          %462 = vsyncadd [#allocation13], %s461
          %s463 = sshll.u32 [#allocation14], 4
          %s464 = int_to_ptr.vmem [resolvable:$true] %s463
          %469 = dma.hbm_to_vmem [thread:$0]  %s10, 512, %s464, [#allocation13], 128, 128, 8
        $region40: #{tpu_custom_call.1} parent=11 // pred_fallthru
          _
        // Predicated region
        $region41: #{tpu_custom_call.1} parent=11 // pred_check
          %p470 = pneg %p305
        $region42: #{tpu_custom_call.1} parent=11 // pred_check_branch
          %472 = sbr.rel (%p470) target = $region44
        $region43: #{tpu_custom_call.1} parent=11 // pred_region
          _
        $region44: #{tpu_custom_call.1} parent=11 // pred_fallthru
          _
        // Predicated region
        $region45: #{tpu_custom_call.1} parent=11 // pred_check
          %p473 = pneg %p326
        $region46: #{tpu_custom_call.1} parent=11 // pred_check_branch
          %475 = sbr.rel (%p473) target = $region48
        $region47: #{tpu_custom_call.1} parent=11 // pred_region
          _
        $region48: #{tpu_custom_call.1} parent=11 // pred_fallthru
          _
        // Predicated region
        $region49: #{tpu_custom_call.1} parent=11 // pred_check
          %p476 = pneg %p347
        $region50: #{tpu_custom_call.1} parent=11 // pred_check_branch
          %478 = sbr.rel (%p476) target = $region52
        $region51: #{tpu_custom_call.1} parent=11 // pred_region
          _
        $region52: #{tpu_custom_call.1} parent=11 // pred_fallthru
          _
        // Predicated region
        $region53: #{tpu_custom_call.1} parent=11 // pred_check
          %p479 = pneg %p368
        $region54: #{tpu_custom_call.1} parent=11 // pred_check_branch
          %481 = sbr.rel (%p479) target = $region56
        $region55: #{tpu_custom_call.1} parent=11 // pred_region
          _
        $region56: #{tpu_custom_call.1} parent=11 // pred_fallthru
          _
      $region12: #{tpu_custom_call.1} parent=5 // pred_fallthru
        _
      %p482 = scmp.lt.s32.totalorder %s33, 2
      // Predicated region
      $region57: #{tpu_custom_call.1} parent=5 // pred_check
        %p483 = pneg %p482
      $region58: #{tpu_custom_call.1} parent=5 // pred_check_branch
        %485 = sbr.rel (%p483) target = $region60
      $region59: #{tpu_custom_call.1} parent=5 // pred_region
        // Predicated region
        $region61: #{tpu_custom_call.1} parent=59 // pred_check
          %p486 = pneg %p53
        $region62: #{tpu_custom_call.1} parent=59 // pred_check_branch
          %488 = sbr.rel (%p486) target = $region64
        $region63: #{tpu_custom_call.1} parent=59 // pred_region
          %s489 = sand.u32 %s43, 1
          %s490 = scalar_lea.sflag [#allocation4], %s489
          %s491 = sand.u32 %s43, 1
          %s492 = smul.addr %s491, 8
          %s493 = scalar_lea.vmem [#allocation3], %s492
          %s495 = ssub.s32 128, 128
          %496 = vsyncadd %s490, %s495
          %s497 = smul.addr %s33, 128
          %s498 = scalar_lea.hbm %s0, %s497
          %s500 = sshll.u32 %s493, 4
          %s501 = int_to_ptr.vmem [resolvable:$true] %s500
          %503 = dma.hbm_to_vmem [thread:$0]  %s498, 128, %s501, %s490
        $region64: #{tpu_custom_call.1} parent=59 // pred_fallthru
          _
        // Predicated region
        $region65: #{tpu_custom_call.1} parent=59 // pred_check
          %p504 = pneg %p79
        $region66: #{tpu_custom_call.1} parent=59 // pred_check_branch
          %506 = sbr.rel (%p504) target = $region68
        $region67: #{tpu_custom_call.1} parent=59 // pred_region
          %s507 = sand.u32 %s33, 1
          %s508 = scalar_lea.sflag [#allocation7], %s507
          %s509 = sand.u32 %s69, 1
          %s510 = smul.addr %s509, 8
          %s511 = scalar_lea.vmem [#allocation6], %s510
          %s513 = ssub.s32 128, 128
          %514 = vsyncadd %s508, %s513
          %s515 = smul.addr %s33, 128
          %s516 = scalar_lea.hbm %s1, %s515
          %s518 = sshll.u32 %s511, 4
          %s519 = int_to_ptr.vmem [resolvable:$true] %s518
          %521 = dma.hbm_to_vmem [thread:$0]  %s516, 128, %s519, %s508
        $region68: #{tpu_custom_call.1} parent=59 // pred_fallthru
          _
        // Predicated region
        $region69: #{tpu_custom_call.1} parent=59 // pred_check
          %p522 = pneg %p105
        $region70: #{tpu_custom_call.1} parent=59 // pred_check_branch
          %524 = sbr.rel (%p522) target = $region72
        $region71: #{tpu_custom_call.1} parent=59 // pred_region
          %s525 = sand.u32 %s33, 1
          %s526 = scalar_lea.sflag [#allocation7], %s525
          %s527 = sand.u32 %s95, 1
          %s528 = smul.addr %s527, 8
          %s529 = scalar_lea.vmem [#allocation8], %s528
          %s531 = ssub.s32 128, 128
          %532 = vsyncadd %s526, %s531
          %s533 = smul.addr %s33, 128
          %s534 = scalar_lea.hbm %s2, %s533
          %s536 = sshll.u32 %s529, 4
          %s537 = int_to_ptr.vmem [resolvable:$true] %s536
          %539 = dma.hbm_to_vmem [thread:$0]  %s534, 128, %s537, %s526
        $region72: #{tpu_custom_call.1} parent=59 // pred_fallthru
          _
        // Predicated region
        $region73: #{tpu_custom_call.1} parent=59 // pred_check
          %p540 = pneg %p131
        $region74: #{tpu_custom_call.1} parent=59 // pred_check_branch
          %542 = sbr.rel (%p540) target = $region76
        $region75: #{tpu_custom_call.1} parent=59 // pred_region
          %p543 = scmp.lt.s32.totalorder %s33, 1
          %s544 = scalar_select %p543, %s33, 1
          %s545 = scalar_lea.vmem %s3, %s544
        $region76: #{tpu_custom_call.1} parent=59 // pred_fallthru
          _
      $region60: #{tpu_custom_call.1} parent=5 // pred_fallthru
        _
      %p546 = scmp.le.s32.totalorder 1, %s33
      %p547 = scmp.lt.s32.totalorder %s33, 3
      %p548 = pnand %p546, %p547
      %p549 = pneg %p548
      // Predicated region
      $region77: #{tpu_custom_call.1} parent=5 // pred_check
        _
      $region78: #{tpu_custom_call.1} parent=5 // pred_check_branch
        %551 = sbr.rel (%p548) target = $region80
      $region79: #{tpu_custom_call.1} parent=5 // pred_region
        %s552 = ssub.s32 %s33, 1
        %s553 = sand.u32 %s46, 1
        %s554 = scalar_lea.sflag [#allocation4], %s553
        %s555 = sand.u32 %s46, 1
        %s556 = smul.addr %s555, 8
        %s557 = scalar_lea.vmem [#allocation3], %s556
        // Predicated region
        $region81: #{tpu_custom_call.1} parent=79 // pred_check
          %p558 = pneg %p59
        $region82: #{tpu_custom_call.1} parent=79 // pred_check_branch
          %560 = sbr.rel (%p558) target = $region84
        $region83: #{tpu_custom_call.1} parent=79 // pred_region
          %561 = dma.done %s554, 128
        $region84: #{tpu_custom_call.1} parent=79 // pred_fallthru
          _
        %s562 = sand.u32 %s38, 1
        %s563 = scalar_lea.sflag [#allocation7], %s562
        %s564 = sand.u32 %s72, 1
        %s565 = smul.addr %s564, 8
        %s566 = scalar_lea.vmem [#allocation6], %s565
        // Predicated region
        $region85: #{tpu_custom_call.1} parent=79 // pred_check
          %p567 = pneg %p85
        $region86: #{tpu_custom_call.1} parent=79 // pred_check_branch
          %569 = sbr.rel (%p567) target = $region88
        $region87: #{tpu_custom_call.1} parent=79 // pred_region
          %570 = dma.done %s563, 128
        $region88: #{tpu_custom_call.1} parent=79 // pred_fallthru
          _
        %s571 = sand.u32 %s38, 1
        %s572 = scalar_lea.sflag [#allocation7], %s571
        %s573 = sand.u32 %s98, 1
        %s574 = smul.addr %s573, 8
        %s575 = scalar_lea.vmem [#allocation8], %s574
        // Predicated region
        $region89: #{tpu_custom_call.1} parent=79 // pred_check
          %p576 = pneg %p111
        $region90: #{tpu_custom_call.1} parent=79 // pred_check_branch
          %578 = sbr.rel (%p576) target = $region92
        $region91: #{tpu_custom_call.1} parent=79 // pred_region
          %579 = dma.done %s572, 128
        $region92: #{tpu_custom_call.1} parent=79 // pred_fallthru
          _
        // Predicated region
        $region93: #{tpu_custom_call.1} parent=79 // pred_check
          %p580 = pneg %p158
        $region94: #{tpu_custom_call.1} parent=79 // pred_check_branch
          %582 = sbr.rel (%p580) target = $region96
        $region95: #{tpu_custom_call.1} parent=79 // pred_region
          %583 = dma.done [#allocation10], 512
        $region96: #{tpu_custom_call.1} parent=79 // pred_fallthru
          _
        // Predicated region
        $region97: #{tpu_custom_call.1} parent=79 // pred_check
          %p584 = pneg %p200
        $region98: #{tpu_custom_call.1} parent=79 // pred_check_branch
          %586 = sbr.rel (%p584) target = $region100
        $region99: #{tpu_custom_call.1} parent=79 // pred_region
          %587 = dma.done [#allocation10], 512
        $region100: #{tpu_custom_call.1} parent=79 // pred_fallthru
          _
        // Predicated region
        $region101: #{tpu_custom_call.1} parent=79 // pred_check
          %p588 = pneg %p242
        $region102: #{tpu_custom_call.1} parent=79 // pred_check_branch
          %590 = sbr.rel (%p588) target = $region104
        $region103: #{tpu_custom_call.1} parent=79 // pred_region
          %591 = dma.done [#allocation13], 512
        $region104: #{tpu_custom_call.1} parent=79 // pred_fallthru
          _
        // Predicated region
        $region105: #{tpu_custom_call.1} parent=79 // pred_check
          %p592 = pneg %p284
        $region106: #{tpu_custom_call.1} parent=79 // pred_check_branch
          %594 = sbr.rel (%p592) target = $region108
        $region107: #{tpu_custom_call.1} parent=79 // pred_region
          %595 = dma.done [#allocation13], 512
        $region108: #{tpu_custom_call.1} parent=79 // pred_fallthru
          _
        %s596 = sand.u32 %s46, 1
        %s597 = scalar_lea.sflag [#allocation4], %s596
        %s598 = sand.u32 %s46, 1
        %s599 = smul.addr %s598, 8
        %s600 = scalar_lea.vmem [#allocation3], %s599
        %p601 = pneg %p59
        %p602 = pneg %p56
        %s603 = sand.u32 %s38, 1
        %s604 = scalar_lea.sflag [#allocation7], %s603
        %s605 = sand.u32 %s72, 1
        %s606 = smul.addr %s605, 8
        %s607 = scalar_lea.vmem [#allocation6], %s606
        %p608 = pneg %p85
        %p609 = pneg %p82
        %s610 = sand.u32 %s38, 1
        %s611 = scalar_lea.sflag [#allocation7], %s610
        %s612 = sand.u32 %s98, 1
        %s613 = smul.addr %s612, 8
        %s614 = scalar_lea.vmem [#allocation8], %s613
        %p615 = pneg %p111
        %p616 = pneg %p108
        %p617 = scmp.lt.s32.totalorder %s38, 1
        %s618 = scalar_select %p617, %s38, 1
        %s619 = scalar_lea.vmem %s3, %s618
        %p620 = pneg %p137
        %p621 = pneg %p134
        %p622 = pneg %p158
        %p623 = pneg %p155
        %p624 = pneg %p179
        %p625 = pneg %p176
        %p626 = pneg %p200
        %p627 = pneg %p197
        %p628 = pneg %p221
        %p629 = pneg %p218
        %p630 = pneg %p242
        %p631 = pneg %p239
        %p632 = pneg %p263
        %p633 = pneg %p260
        %p634 = pneg %p284
        %p635 = pneg %p281
        %p636 = pneg %p305
        %p637 = pneg %p302
        %p638 = pneg %p326
        %p639 = pneg %p323
        %p640 = pneg %p347
        %p641 = pneg %p344
        %p642 = pneg %p368
        %p643 = pneg %p365
        %p644 = pneg %p394
        %p645 = pneg %p391
        %s646 = sand.u32 %s381, 1
        %s647 = scalar_lea.sflag [#allocation5], %s646
        %s648 = sand.u32 %s381, 1
        %s649 = smul.addr %s648, 8
        %s650 = scalar_lea.vmem [#allocation15], %s649
        %p651 = scmp.lt.s32.totalorder %s38, 1
        %s652 = scalar_select %p651, %s38, 1
        %s653 = scalar_lea.vmem %s3, %s652
        %v654 = vld [vmem:[%s557] sm:$0xff]
        %v655 = vld [vmem:[%s566] sm:$0xff]
        %v656 = vld [vmem:[%s575] sm:$0xff]
        %v657 = vld [vmem:[#allocation9] sm:$0xff]
        %v658 = vld [vmem:[#allocation9 + $0x8] sm:$0xff]
        %v659 = vld [vmem:[#allocation9 + $0x10] sm:$0xff]
        %v660 = vld [vmem:[#allocation9 + $0x18] sm:$0xff]
        %v661 = vld [vmem:[%s5] sm:$0x1]
        %v663 = vlaneseq
        %v664 = vshrl.u32 %v663, 7
        %v665 = vsub.s32 0, %v664
        %v666 = vrot.slane %v661, %v665
        %vm668 = vcmask 261120
        %v670 = vsel %vm668, %v654, 0
        %672 = vmatprep.subr.mxu0 0.0
        %673 = vmatpush1.msra.mxu0 0.0
        %674 = vmatprep.subr.mxu0 0.0
        %675 = vmatpush1.msra.mxu0 0.0
        %676 = vmatprep.subr.mxu0 0.0
        %677 = vmatpush1.msra.mxu0 0.0
        %678 = vmatprep.subr.mxu0 0.0
        %679 = vmatpush1.msra.mxu0 0.0
        %680 = vmatprep.subr.mxu0 0.0
        %681 = vmatpush1.msra.mxu0 0.0
        %682 = vmatprep.subr.mxu0 0.0
        %683 = vmatpush1.msra.mxu0 0.0
        %684 = vmatprep.subr.mxu0 0.0
        %685 = vmatpush1.msra.mxu0 0.0
        %686 = vmatprep.subr.mxu0 0.0
        %687 = vmatpush1.msra.mxu0 0.0
        %688 = vmatprep.subr.mxu0 0.0
        %689 = vmatpush1.msra.mxu0 0.0
        %690 = vmatprep.subr.mxu0 0.0
        %691 = vmatpush1.msra.mxu0 0.0
        %692 = vmatprep.subr.mxu0 0.0
        %693 = vmatpush1.msra.mxu0 0.0
        %694 = vmatprep.subr.mxu0 0.0
        %695 = vmatpush1.msra.mxu0 0.0
        %696 = vmatprep.subr.mxu0 0.0
        %697 = vmatpush1.msra.mxu0 %v660
        %698 = vmatprep.subr.mxu0 0.0
        %699 = vmatpush1.msra.mxu0 %v659
        %700 = vmatprep.subr.mxu0 0.0
        %701 = vmatpush1.msra.mxu0 %v658
        %702 = vmatprep.subr.mxu0 0.0
        %703 = vmatpush1.msra.mxu0 %v657
        %704 = vmatprep.subr.mxu0 0.0
        %705 = vmatpush2.msra.mxu0 0.0
        %706 = vmatprep.subr.mxu0 0.0
        %707 = vmatpush2.msra.mxu0 0.0
        %708 = vmatprep.subr.mxu0 0.0
        %709 = vmatpush2.msra.mxu0 0.0
        %710 = vmatprep.subr.mxu0 0.0
        %711 = vmatpush2.msra.mxu0 0.0
        %712 = vmatprep.subr.mxu0 0.0
        %713 = vmatpush2.msra.mxu0 0.0
        %714 = vmatprep.subr.mxu0 0.0
        %715 = vmatpush2.msra.mxu0 0.0
        %716 = vmatprep.subr.mxu0 0.0
        %717 = vmatpush2.msra.mxu0 0.0
        %718 = vmatprep.subr.mxu0 0.0
        %719 = vmatpush2.msra.mxu0 0.0
        %720 = vmatprep.subr.mxu0 0.0
        %721 = vmatpush2.msra.mxu0 0.0
        %722 = vmatprep.subr.mxu0 0.0
        %723 = vmatpush2.msra.mxu0 0.0
        %724 = vmatprep.subr.mxu0 0.0
        %725 = vmatpush2.msra.mxu0 0.0
        %726 = vmatprep.subr.mxu0 0.0
        %727 = vmatpush2.msra.mxu0 0.0
        %728 = vmatprep.subr.mxu0 0.0
        %729 = vmatpush2.msra.mxu0 0.0
        %730 = vmatprep.subr.mxu0 0.0
        %731 = vmatpush2.msra.mxu0 0.0
        %732 = vmatprep.subr.mxu0 0.0
        %733 = vmatpush2.msra.mxu0 0.0
        %734 = vmatprep.subr.mxu0 0.0
        %735 = vmatpush2.msra.mxu0 0.0
        %736 = vmatprep.mubr.f32.mxu0 0.0
        %737 = vmatmul.mubr.f32.gmra.mxu0 %v670
        %v738 = vpop.f32.mrf.mxu0
        %v739 = vadd.f32 %v666, %v738
        %v740 = vpop.f32.mrf.mxu0
        %741 = vdwg.mxu0
        %v742 = vmul.f32 %v739, 0.5
        %v743 = vld [vmem:[#allocation11] sm:$0xff]
        %v744 = vld [vmem:[#allocation11 + $0x8] sm:$0xff]
        %v745 = vld [vmem:[#allocation11 + $0x10] sm:$0xff]
        %v746 = vld [vmem:[#allocation11 + $0x18] sm:$0xff]
        %v747 = vld [vmem:[%s7] sm:$0x1]
        %v749 = vlaneseq
        %v750 = vshrl.u32 %v749, 7
        %v751 = vsub.s32 0, %v750
        %v752 = vrot.slane %v747, %v751
        %v755 = vsel %vm668, %v655, 0
        %757 = vmatprep.subr.mxu0 0.0
        %758 = vmatpush1.msra.mxu0 0.0
        %759 = vmatprep.subr.mxu0 0.0
        %760 = vmatpush1.msra.mxu0 0.0
        %761 = vmatprep.subr.mxu0 0.0
        %762 = vmatpush1.msra.mxu0 0.0
        %763 = vmatprep.subr.mxu0 0.0
        %764 = vmatpush1.msra.mxu0 0.0
        %765 = vmatprep.subr.mxu0 0.0
        %766 = vmatpush1.msra.mxu0 0.0
        %767 = vmatprep.subr.mxu0 0.0
        %768 = vmatpush1.msra.mxu0 0.0
        %769 = vmatprep.subr.mxu0 0.0
        %770 = vmatpush1.msra.mxu0 0.0
        %771 = vmatprep.subr.mxu0 0.0
        %772 = vmatpush1.msra.mxu0 0.0
        %773 = vmatprep.subr.mxu0 0.0
        %774 = vmatpush1.msra.mxu0 0.0
        %775 = vmatprep.subr.mxu0 0.0
        %776 = vmatpush1.msra.mxu0 0.0
        %777 = vmatprep.subr.mxu0 0.0
        %778 = vmatpush1.msra.mxu0 0.0
        %779 = vmatprep.subr.mxu0 0.0
        %780 = vmatpush1.msra.mxu0 0.0
        %781 = vmatprep.subr.mxu0 0.0
        %782 = vmatpush1.msra.mxu0 %v746
        %783 = vmatprep.subr.mxu0 0.0
        %784 = vmatpush1.msra.mxu0 %v745
        %785 = vmatprep.subr.mxu0 0.0
        %786 = vmatpush1.msra.mxu0 %v744
        %787 = vmatprep.subr.mxu0 0.0
        %788 = vmatpush1.msra.mxu0 %v743
        %789 = vmatprep.subr.mxu0 0.0
        %790 = vmatpush2.msra.mxu0 0.0
        %791 = vmatprep.subr.mxu0 0.0
        %792 = vmatpush2.msra.mxu0 0.0
        %793 = vmatprep.subr.mxu0 0.0
        %794 = vmatpush2.msra.mxu0 0.0
        %795 = vmatprep.subr.mxu0 0.0
        %796 = vmatpush2.msra.mxu0 0.0
        %797 = vmatprep.subr.mxu0 0.0
        %798 = vmatpush2.msra.mxu0 0.0
        %799 = vmatprep.subr.mxu0 0.0
        %800 = vmatpush2.msra.mxu0 0.0
        %801 = vmatprep.subr.mxu0 0.0
        %802 = vmatpush2.msra.mxu0 0.0
        %803 = vmatprep.subr.mxu0 0.0
        %804 = vmatpush2.msra.mxu0 0.0
        %805 = vmatprep.subr.mxu0 0.0
        %806 = vmatpush2.msra.mxu0 0.0
        %807 = vmatprep.subr.mxu0 0.0
        %808 = vmatpush2.msra.mxu0 0.0
        %809 = vmatprep.subr.mxu0 0.0
        %810 = vmatpush2.msra.mxu0 0.0
        %811 = vmatprep.subr.mxu0 0.0
        %812 = vmatpush2.msra.mxu0 0.0
        %813 = vmatprep.subr.mxu0 0.0
        %814 = vmatpush2.msra.mxu0 0.0
        %815 = vmatprep.subr.mxu0 0.0
        %816 = vmatpush2.msra.mxu0 0.0
        %817 = vmatprep.subr.mxu0 0.0
        %818 = vmatpush2.msra.mxu0 0.0
        %819 = vmatprep.subr.mxu0 0.0
        %820 = vmatpush2.msra.mxu0 0.0
        %821 = vmatprep.mubr.f32.mxu0 0.0
        %822 = vmatmul.mubr.f32.gmra.mxu0 %v755
        %v823 = vpop.f32.mrf.mxu0
        %v824 = vadd.f32 %v752, %v823
        %v825 = vpop.f32.mrf.mxu0
        %826 = vdwg.mxu0
        %v827 = vld [vmem:[#allocation12] sm:$0xff]
        %v828 = vld [vmem:[#allocation12 + $0x8] sm:$0xff]
        %v829 = vld [vmem:[#allocation12 + $0x10] sm:$0xff]
        %v830 = vld [vmem:[#allocation12 + $0x18] sm:$0xff]
        %v831 = vld [vmem:[%s9] sm:$0x1]
        %v833 = vlaneseq
        %v834 = vshrl.u32 %v833, 7
        %v835 = vsub.s32 0, %v834
        %v836 = vrot.slane %v831, %v835
        %v839 = vsel %vm668, %v656, 0
        %841 = vmatprep.subr.mxu0 0.0
        %842 = vmatpush1.msra.mxu0 0.0
        %843 = vmatprep.subr.mxu0 0.0
        %844 = vmatpush1.msra.mxu0 0.0
        %845 = vmatprep.subr.mxu0 0.0
        %846 = vmatpush1.msra.mxu0 0.0
        %847 = vmatprep.subr.mxu0 0.0
        %848 = vmatpush1.msra.mxu0 0.0
        %849 = vmatprep.subr.mxu0 0.0
        %850 = vmatpush1.msra.mxu0 0.0
        %851 = vmatprep.subr.mxu0 0.0
        %852 = vmatpush1.msra.mxu0 0.0
        %853 = vmatprep.subr.mxu0 0.0
        %854 = vmatpush1.msra.mxu0 0.0
        %855 = vmatprep.subr.mxu0 0.0
        %856 = vmatpush1.msra.mxu0 0.0
        %857 = vmatprep.subr.mxu0 0.0
        %858 = vmatpush1.msra.mxu0 0.0
        %859 = vmatprep.subr.mxu0 0.0
        %860 = vmatpush1.msra.mxu0 0.0
        %861 = vmatprep.subr.mxu0 0.0
        %862 = vmatpush1.msra.mxu0 0.0
        %863 = vmatprep.subr.mxu0 0.0
        %864 = vmatpush1.msra.mxu0 0.0
        %865 = vmatprep.subr.mxu0 0.0
        %866 = vmatpush1.msra.mxu0 %v830
        %867 = vmatprep.subr.mxu0 0.0
        %868 = vmatpush1.msra.mxu0 %v829
        %869 = vmatprep.subr.mxu0 0.0
        %870 = vmatpush1.msra.mxu0 %v828
        %871 = vmatprep.subr.mxu0 0.0
        %872 = vmatpush1.msra.mxu0 %v827
        %873 = vmatprep.subr.mxu0 0.0
        %874 = vmatpush2.msra.mxu0 0.0
        %875 = vmatprep.subr.mxu0 0.0
        %876 = vmatpush2.msra.mxu0 0.0
        %877 = vmatprep.subr.mxu0 0.0
        %878 = vmatpush2.msra.mxu0 0.0
        %879 = vmatprep.subr.mxu0 0.0
        %880 = vmatpush2.msra.mxu0 0.0
        %881 = vmatprep.subr.mxu0 0.0
        %882 = vmatpush2.msra.mxu0 0.0
        %883 = vmatprep.subr.mxu0 0.0
        %884 = vmatpush2.msra.mxu0 0.0
        %885 = vmatprep.subr.mxu0 0.0
        %886 = vmatpush2.msra.mxu0 0.0
        %887 = vmatprep.subr.mxu0 0.0
        %888 = vmatpush2.msra.mxu0 0.0
        %889 = vmatprep.subr.mxu0 0.0
        %890 = vmatpush2.msra.mxu0 0.0
        %891 = vmatprep.subr.mxu0 0.0
        %892 = vmatpush2.msra.mxu0 0.0
        %893 = vmatprep.subr.mxu0 0.0
        %894 = vmatpush2.msra.mxu0 0.0
        %895 = vmatprep.subr.mxu0 0.0
        %896 = vmatpush2.msra.mxu0 0.0
        %897 = vmatprep.subr.mxu0 0.0
        %898 = vmatpush2.msra.mxu0 0.0
        %899 = vmatprep.subr.mxu0 0.0
        %900 = vmatpush2.msra.mxu0 0.0
        %901 = vmatprep.subr.mxu0 0.0
        %902 = vmatpush2.msra.mxu0 0.0
        %903 = vmatprep.subr.mxu0 0.0
        %904 = vmatpush2.msra.mxu0 0.0
        %905 = vmatprep.mubr.f32.mxu0 0.0
        %906 = vmatmul.mubr.f32.gmra.mxu0 %v839
        %v907 = vpop.f32.mrf.mxu0
        %v908 = vadd.f32 %v836, %v907
        %v909 = vpop.f32.mrf.mxu0
        %910 = vdwg.mxu0
        %s911 = sld [smem:[#allocation2]]
        %v912 = vld [vmem:[%s653] sm:$0x1]
        %v913 = vstv %s911
        %v914 = vmul.f32 %v913, %v912
        %vm915 = vcmask 31744
        %v917 = vsel %vm915, %v742, 0
        %v920 = vsel %vm915, %v824, 0
        %922 = vmatprep.subr.mxu0 0.0
        %923 = vmatpush1.xpose.msra.mxu0 0.0
        %924 = vmatprep.subr.mxu0 0.0
        %925 = vmatpush1.xpose.msra.mxu0 0.0
        %926 = vmatprep.subr.mxu0 0.0
        %927 = vmatpush1.xpose.msra.mxu0 0.0
        %928 = vmatprep.subr.mxu0 0.0
        %929 = vmatpush1.xpose.msra.mxu0 0.0
        %930 = vmatprep.subr.mxu0 0.0
        %931 = vmatpush1.xpose.msra.mxu0 0.0
        %932 = vmatprep.subr.mxu0 0.0
        %933 = vmatpush1.xpose.msra.mxu0 0.0
        %934 = vmatprep.subr.mxu0 0.0
        %935 = vmatpush1.xpose.msra.mxu0 0.0
        %936 = vmatprep.subr.mxu0 0.0
        %937 = vmatpush1.xpose.msra.mxu0 0.0
        %938 = vmatprep.subr.mxu0 0.0
        %939 = vmatpush1.xpose.msra.mxu0 0.0
        %940 = vmatprep.subr.mxu0 0.0
        %941 = vmatpush1.xpose.msra.mxu0 0.0
        %942 = vmatprep.subr.mxu0 0.0
        %943 = vmatpush1.xpose.msra.mxu0 0.0
        %944 = vmatprep.subr.mxu0 0.0
        %945 = vmatpush1.xpose.msra.mxu0 0.0
        %946 = vmatprep.subr.mxu0 0.0
        %947 = vmatpush1.xpose.msra.mxu0 0.0
        %948 = vmatprep.subr.mxu0 0.0
        %949 = vmatpush1.xpose.msra.mxu0 0.0
        %950 = vmatprep.subr.mxu0 0.0
        %951 = vmatpush1.xpose.msra.mxu0 0.0
        %952 = vmatprep.subr.mxu0 0.0
        %953 = vmatpush1.xpose.msra.mxu0 %v920
        %954 = vmatprep.subr.mxu0 0.0
        %955 = vmatpush2.xpose.msra.mxu0 0.0
        %956 = vmatprep.subr.mxu0 0.0
        %957 = vmatpush2.xpose.msra.mxu0 0.0
        %958 = vmatprep.subr.mxu0 0.0
        %959 = vmatpush2.xpose.msra.mxu0 0.0
        %960 = vmatprep.subr.mxu0 0.0
        %961 = vmatpush2.xpose.msra.mxu0 0.0
        %962 = vmatprep.subr.mxu0 0.0
        %963 = vmatpush2.xpose.msra.mxu0 0.0
        %964 = vmatprep.subr.mxu0 0.0
        %965 = vmatpush2.xpose.msra.mxu0 0.0
        %966 = vmatprep.subr.mxu0 0.0
        %967 = vmatpush2.xpose.msra.mxu0 0.0
        %968 = vmatprep.subr.mxu0 0.0
        %969 = vmatpush2.xpose.msra.mxu0 0.0
        %970 = vmatprep.subr.mxu0 0.0
        %971 = vmatpush2.xpose.msra.mxu0 0.0
        %972 = vmatprep.subr.mxu0 0.0
        %973 = vmatpush2.xpose.msra.mxu0 0.0
        %974 = vmatprep.subr.mxu0 0.0
        %975 = vmatpush2.xpose.msra.mxu0 0.0
        %976 = vmatprep.subr.mxu0 0.0
        %977 = vmatpush2.xpose.msra.mxu0 0.0
        %978 = vmatprep.subr.mxu0 0.0
        %979 = vmatpush2.xpose.msra.mxu0 0.0
        %980 = vmatprep.subr.mxu0 0.0
        %981 = vmatpush2.xpose.msra.mxu0 0.0
        %982 = vmatprep.subr.mxu0 0.0
        %983 = vmatpush2.xpose.msra.mxu0 0.0
        %984 = vmatprep.subr.mxu0 0.0
        %985 = vmatpush2.xpose.msra.mxu0 0.0
        %986 = vmatprep.mubr.f32.mxu0 0.0
        %987 = vmatmul.mubr.f32.gmra.mxu0 %v917
        %v988 = vpop.f32.mrf.mxu0
        %v989 = vadd.f32 0.0, %v988
        %v990 = vpop.f32.mrf.mxu0
        %991 = vdwg.mxu0
        %v993 = vlaneseq
        %v994 = vshrl.u32 %v993, 7
        %v995 = vsub.s32 0, %v994
        %v996 = vrot.slane %v914, %v995
        %v998 = vsub.f32 %v989, %v996
        %vm999 = vcmask 64512
        %v1000 = vsel %vm999, %v998, -inf
        %1001 = vmax.xlane.f32.xlu0 %v1000
        %v1002 = vpop.xlane.xlu0 %1001
        %v1003 = vsub.f32 %v998, %v1002
        %v1004 = vmul.f32 %v1003, 1.442695
        %v1005 = vpow.pop %v1004
        %v1006 = vsel %vm999, %v1005, 0.0
        %1007 = vadd.xlane.f32.xlu0 %v1006
        %v1008 = vpop.xlane.xlu0 %1007
        %v1010 = vsel %vm999, %v1005, 0
        %1012 = vmatprep.subr.mxu0 0.0
        %1013 = vmatpush1.msra.mxu0 0.0
        %1014 = vmatprep.subr.mxu0 0.0
        %1015 = vmatpush1.msra.mxu0 0.0
        %1016 = vmatprep.subr.mxu0 0.0
        %1017 = vmatpush1.msra.mxu0 0.0
        %1018 = vmatprep.subr.mxu0 0.0
        %1019 = vmatpush1.msra.mxu0 0.0
        %1020 = vmatprep.subr.mxu0 0.0
        %1021 = vmatpush1.msra.mxu0 0.0
        %1022 = vmatprep.subr.mxu0 0.0
        %1023 = vmatpush1.msra.mxu0 0.0
        %1024 = vmatprep.subr.mxu0 0.0
        %1025 = vmatpush1.msra.mxu0 0.0
        %1026 = vmatprep.subr.mxu0 0.0
        %1027 = vmatpush1.msra.mxu0 0.0
        %1028 = vmatprep.subr.mxu0 0.0
        %1029 = vmatpush1.msra.mxu0 0.0
        %1030 = vmatprep.subr.mxu0 0.0
        %1031 = vmatpush1.msra.mxu0 0.0
        %1032 = vmatprep.subr.mxu0 0.0
        %1033 = vmatpush1.msra.mxu0 0.0
        %1034 = vmatprep.subr.mxu0 0.0
        %1035 = vmatpush1.msra.mxu0 0.0
        %1036 = vmatprep.subr.mxu0 0.0
        %1037 = vmatpush1.msra.mxu0 0.0
        %1038 = vmatprep.subr.mxu0 0.0
        %1039 = vmatpush1.msra.mxu0 0.0
        %1040 = vmatprep.subr.mxu0 0.0
        %1041 = vmatpush1.msra.mxu0 0.0
        %1042 = vmatprep.subr.mxu0 0.0
        %1043 = vmatpush1.msra.mxu0 %v908
        %1044 = vmatprep.subr.mxu0 0.0
        %1045 = vmatpush2.msra.mxu0 0.0
        %1046 = vmatprep.subr.mxu0 0.0
        %1047 = vmatpush2.msra.mxu0 0.0
        %1048 = vmatprep.subr.mxu0 0.0
        %1049 = vmatpush2.msra.mxu0 0.0
        %1050 = vmatprep.subr.mxu0 0.0
        %1051 = vmatpush2.msra.mxu0 0.0
        %1052 = vmatprep.subr.mxu0 0.0
        %1053 = vmatpush2.msra.mxu0 0.0
        %1054 = vmatprep.subr.mxu0 0.0
        %1055 = vmatpush2.msra.mxu0 0.0
        %1056 = vmatprep.subr.mxu0 0.0
        %1057 = vmatpush2.msra.mxu0 0.0
        %1058 = vmatprep.subr.mxu0 0.0
        %1059 = vmatpush2.msra.mxu0 0.0
        %1060 = vmatprep.subr.mxu0 0.0
        %1061 = vmatpush2.msra.mxu0 0.0
        %1062 = vmatprep.subr.mxu0 0.0
        %1063 = vmatpush2.msra.mxu0 0.0
        %1064 = vmatprep.subr.mxu0 0.0
        %1065 = vmatpush2.msra.mxu0 0.0
        %1066 = vmatprep.subr.mxu0 0.0
        %1067 = vmatpush2.msra.mxu0 0.0
        %1068 = vmatprep.subr.mxu0 0.0
        %1069 = vmatpush2.msra.mxu0 0.0
        %1070 = vmatprep.subr.mxu0 0.0
        %1071 = vmatpush2.msra.mxu0 0.0
        %1072 = vmatprep.subr.mxu0 0.0
        %1073 = vmatpush2.msra.mxu0 0.0
        %1074 = vmatprep.subr.mxu0 0.0
        %1075 = vmatpush2.msra.mxu0 0.0
        %1076 = vmatprep.mubr.f32.mxu0 0.0
        %1077 = vmatmul.mubr.f32.gmra.mxu0 %v1010
        %v1078 = vpop.f32.mrf.mxu0
        %v1079 = vadd.f32 0.0, %v1078
        %v1080 = vpop.f32.mrf.mxu0
        %1081 = vdwg.mxu0
        %v1082 = vrcp.pop %v1008
        %v1083 = vmul.f32 %v1079, %v1082
        %1084 = vrot.lane.b32.xlu0 %v742, 124
        %v1085 = vpop.permute.xlu0 %1084
        %1086 = vrot.lane.b32.xlu0 %v824, 124
        %v1087 = vpop.permute.xlu0 %1086
        %v1088 = vsel %vm915, %v1085, 0
        %v1090 = vsel %vm915, %v1087, 0
        %1092 = vmatprep.subr.mxu0 0.0
        %1093 = vmatpush1.xpose.msra.mxu0 0.0
        %1094 = vmatprep.subr.mxu0 0.0
        %1095 = vmatpush1.xpose.msra.mxu0 0.0
        %1096 = vmatprep.subr.mxu0 0.0
        %1097 = vmatpush1.xpose.msra.mxu0 0.0
        %1098 = vmatprep.subr.mxu0 0.0
        %1099 = vmatpush1.xpose.msra.mxu0 0.0
        %1100 = vmatprep.subr.mxu0 0.0
        %1101 = vmatpush1.xpose.msra.mxu0 0.0
        %1102 = vmatprep.subr.mxu0 0.0
        %1103 = vmatpush1.xpose.msra.mxu0 0.0
        %1104 = vmatprep.subr.mxu0 0.0
        %1105 = vmatpush1.xpose.msra.mxu0 0.0
        %1106 = vmatprep.subr.mxu0 0.0
        %1107 = vmatpush1.xpose.msra.mxu0 0.0
        %1108 = vmatprep.subr.mxu0 0.0
        %1109 = vmatpush1.xpose.msra.mxu0 0.0
        %1110 = vmatprep.subr.mxu0 0.0
        %1111 = vmatpush1.xpose.msra.mxu0 0.0
        %1112 = vmatprep.subr.mxu0 0.0
        %1113 = vmatpush1.xpose.msra.mxu0 0.0
        %1114 = vmatprep.subr.mxu0 0.0
        %1115 = vmatpush1.xpose.msra.mxu0 0.0
        %1116 = vmatprep.subr.mxu0 0.0
        %1117 = vmatpush1.xpose.msra.mxu0 0.0
        %1118 = vmatprep.subr.mxu0 0.0
        %1119 = vmatpush1.xpose.msra.mxu0 0.0
        %1120 = vmatprep.subr.mxu0 0.0
        %1121 = vmatpush1.xpose.msra.mxu0 0.0
        %1122 = vmatprep.subr.mxu0 0.0
        %1123 = vmatpush1.xpose.msra.mxu0 %v1090
        %1124 = vmatprep.subr.mxu0 0.0
        %1125 = vmatpush2.xpose.msra.mxu0 0.0
        %1126 = vmatprep.subr.mxu0 0.0
        %1127 = vmatpush2.xpose.msra.mxu0 0.0
        %1128 = vmatprep.subr.mxu0 0.0
        %1129 = vmatpush2.xpose.msra.mxu0 0.0
        %1130 = vmatprep.subr.mxu0 0.0
        %1131 = vmatpush2.xpose.msra.mxu0 0.0
        %1132 = vmatprep.subr.mxu0 0.0
        %1133 = vmatpush2.xpose.msra.mxu0 0.0
        %1134 = vmatprep.subr.mxu0 0.0
        %1135 = vmatpush2.xpose.msra.mxu0 0.0
        %1136 = vmatprep.subr.mxu0 0.0
        %1137 = vmatpush2.xpose.msra.mxu0 0.0
        %1138 = vmatprep.subr.mxu0 0.0
        %1139 = vmatpush2.xpose.msra.mxu0 0.0
        %1140 = vmatprep.subr.mxu0 0.0
        %1141 = vmatpush2.xpose.msra.mxu0 0.0
        %1142 = vmatprep.subr.mxu0 0.0
        %1143 = vmatpush2.xpose.msra.mxu0 0.0
        %1144 = vmatprep.subr.mxu0 0.0
        %1145 = vmatpush2.xpose.msra.mxu0 0.0
        %1146 = vmatprep.subr.mxu0 0.0
        %1147 = vmatpush2.xpose.msra.mxu0 0.0
        %1148 = vmatprep.subr.mxu0 0.0
        %1149 = vmatpush2.xpose.msra.mxu0 0.0
        %1150 = vmatprep.subr.mxu0 0.0
        %1151 = vmatpush2.xpose.msra.mxu0 0.0
        %1152 = vmatprep.subr.mxu0 0.0
        %1153 = vmatpush2.xpose.msra.mxu0 0.0
        %1154 = vmatprep.subr.mxu0 0.0
        %1155 = vmatpush2.xpose.msra.mxu0 0.0
        %1156 = vmatprep.mubr.f32.mxu0 0.0
        %1157 = vmatmul.mubr.f32.gmra.mxu0 %v1088
        %v1158 = vpop.f32.mrf.mxu0
        %v1159 = vadd.f32 0.0, %v1158
        %v1160 = vpop.f32.mrf.mxu0
        %1161 = vdwg.mxu0
        %v1162 = vsub.f32 %v1159, %v996
        %v1163 = vsel %vm999, %v1162, -inf
        %1164 = vmax.xlane.f32.xlu0 %v1163
        %v1165 = vpop.xlane.xlu0 %1164
        %v1166 = vsub.f32 %v1162, %v1165
        %v1167 = vmul.f32 %v1166, 1.442695
        %v1168 = vpow.pop %v1167
        %v1169 = vsel %vm999, %v1168, 0.0
        %1170 = vadd.xlane.f32.xlu0 %v1169
        %v1171 = vpop.xlane.xlu0 %1170
        %1173 = vrot.lane.b32.xlu0 %v908, 124
        %v1174 = vpop.permute.xlu0 %1173
        %v1177 = vsel %vm999, %v1168, 0
        %1179 = vmatprep.subr.mxu0 0.0
        %1180 = vmatpush1.msra.mxu0 0.0
        %1181 = vmatprep.subr.mxu0 0.0
        %1182 = vmatpush1.msra.mxu0 0.0
        %1183 = vmatprep.subr.mxu0 0.0
        %1184 = vmatpush1.msra.mxu0 0.0
        %1185 = vmatprep.subr.mxu0 0.0
        %1186 = vmatpush1.msra.mxu0 0.0
        %1187 = vmatprep.subr.mxu0 0.0
        %1188 = vmatpush1.msra.mxu0 0.0
        %1189 = vmatprep.subr.mxu0 0.0
        %1190 = vmatpush1.msra.mxu0 0.0
        %1191 = vmatprep.subr.mxu0 0.0
        %1192 = vmatpush1.msra.mxu0 0.0
        %1193 = vmatprep.subr.mxu0 0.0
        %1194 = vmatpush1.msra.mxu0 0.0
        %1195 = vmatprep.subr.mxu0 0.0
        %1196 = vmatpush1.msra.mxu0 0.0
        %1197 = vmatprep.subr.mxu0 0.0
        %1198 = vmatpush1.msra.mxu0 0.0
        %1199 = vmatprep.subr.mxu0 0.0
        %1200 = vmatpush1.msra.mxu0 0.0
        %1201 = vmatprep.subr.mxu0 0.0
        %1202 = vmatpush1.msra.mxu0 0.0
        %1203 = vmatprep.subr.mxu0 0.0
        %1204 = vmatpush1.msra.mxu0 0.0
        %1205 = vmatprep.subr.mxu0 0.0
        %1206 = vmatpush1.msra.mxu0 0.0
        %1207 = vmatprep.subr.mxu0 0.0
        %1208 = vmatpush1.msra.mxu0 0.0
        %1209 = vmatprep.subr.mxu0 0.0
        %1210 = vmatpush1.msra.mxu0 %v1174
        %1211 = vmatprep.subr.mxu0 0.0
        %1212 = vmatpush2.msra.mxu0 0.0
        %1213 = vmatprep.subr.mxu0 0.0
        %1214 = vmatpush2.msra.mxu0 0.0
        %1215 = vmatprep.subr.mxu0 0.0
        %1216 = vmatpush2.msra.mxu0 0.0
        %1217 = vmatprep.subr.mxu0 0.0
        %1218 = vmatpush2.msra.mxu0 0.0
        %1219 = vmatprep.subr.mxu0 0.0
        %1220 = vmatpush2.msra.mxu0 0.0
        %1221 = vmatprep.subr.mxu0 0.0
        %1222 = vmatpush2.msra.mxu0 0.0
        %1223 = vmatprep.subr.mxu0 0.0
        %1224 = vmatpush2.msra.mxu0 0.0
        %1225 = vmatprep.subr.mxu0 0.0
        %1226 = vmatpush2.msra.mxu0 0.0
        %1227 = vmatprep.subr.mxu0 0.0
        %1228 = vmatpush2.msra.mxu0 0.0
        %1229 = vmatprep.subr.mxu0 0.0
        %1230 = vmatpush2.msra.mxu0 0.0
        %1231 = vmatprep.subr.mxu0 0.0
        %1232 = vmatpush2.msra.mxu0 0.0
        %1233 = vmatprep.subr.mxu0 0.0
        %1234 = vmatpush2.msra.mxu0 0.0
        %1235 = vmatprep.subr.mxu0 0.0
        %1236 = vmatpush2.msra.mxu0 0.0
        %1237 = vmatprep.subr.mxu0 0.0
        %1238 = vmatpush2.msra.mxu0 0.0
        %1239 = vmatprep.subr.mxu0 0.0
        %1240 = vmatpush2.msra.mxu0 0.0
        %1241 = vmatprep.subr.mxu0 0.0
        %1242 = vmatpush2.msra.mxu0 0.0
        %1243 = vmatprep.mubr.f32.mxu0 0.0
        %1244 = vmatmul.mubr.f32.gmra.mxu0 %v1177
        %v1245 = vpop.f32.mrf.mxu0
        %v1246 = vadd.f32 0.0, %v1245
        %v1247 = vpop.f32.mrf.mxu0
        %1248 = vdwg.mxu0
        %v1249 = vrcp.pop %v1171
        %v1250 = vmul.f32 %v1246, %v1249
        %1251 = vrot.lane.b32.xlu0 %v742, 120
        %v1252 = vpop.permute.xlu0 %1251
        %1253 = vrot.lane.b32.xlu0 %v824, 120
        %v1254 = vpop.permute.xlu0 %1253
        %v1255 = vsel %vm915, %v1252, 0
        %v1257 = vsel %vm915, %v1254, 0
        %1259 = vmatprep.subr.mxu0 0.0
        %1260 = vmatpush1.xpose.msra.mxu0 0.0
        %1261 = vmatprep.subr.mxu0 0.0
        %1262 = vmatpush1.xpose.msra.mxu0 0.0
        %1263 = vmatprep.subr.mxu0 0.0
        %1264 = vmatpush1.xpose.msra.mxu0 0.0
        %1265 = vmatprep.subr.mxu0 0.0
        %1266 = vmatpush1.xpose.msra.mxu0 0.0
        %1267 = vmatprep.subr.mxu0 0.0
        %1268 = vmatpush1.xpose.msra.mxu0 0.0
        %1269 = vmatprep.subr.mxu0 0.0
        %1270 = vmatpush1.xpose.msra.mxu0 0.0
        %1271 = vmatprep.subr.mxu0 0.0
        %1272 = vmatpush1.xpose.msra.mxu0 0.0
        %1273 = vmatprep.subr.mxu0 0.0
        %1274 = vmatpush1.xpose.msra.mxu0 0.0
        %1275 = vmatprep.subr.mxu0 0.0
        %1276 = vmatpush1.xpose.msra.mxu0 0.0
        %1277 = vmatprep.subr.mxu0 0.0
        %1278 = vmatpush1.xpose.msra.mxu0 0.0
        %1279 = vmatprep.subr.mxu0 0.0
        %1280 = vmatpush1.xpose.msra.mxu0 0.0
        %1281 = vmatprep.subr.mxu0 0.0
        %1282 = vmatpush1.xpose.msra.mxu0 0.0
        %1283 = vmatprep.subr.mxu0 0.0
        %1284 = vmatpush1.xpose.msra.mxu0 0.0
        %1285 = vmatprep.subr.mxu0 0.0
        %1286 = vmatpush1.xpose.msra.mxu0 0.0
        %1287 = vmatprep.subr.mxu0 0.0
        %1288 = vmatpush1.xpose.msra.mxu0 0.0
        %1289 = vmatprep.subr.mxu0 0.0
        %1290 = vmatpush1.xpose.msra.mxu0 %v1257
        %1291 = vmatprep.subr.mxu0 0.0
        %1292 = vmatpush2.xpose.msra.mxu0 0.0
        %1293 = vmatprep.subr.mxu0 0.0
        %1294 = vmatpush2.xpose.msra.mxu0 0.0
        %1295 = vmatprep.subr.mxu0 0.0
        %1296 = vmatpush2.xpose.msra.mxu0 0.0
        %1297 = vmatprep.subr.mxu0 0.0
        %1298 = vmatpush2.xpose.msra.mxu0 0.0
        %1299 = vmatprep.subr.mxu0 0.0
        %1300 = vmatpush2.xpose.msra.mxu0 0.0
        %1301 = vmatprep.subr.mxu0 0.0
        %1302 = vmatpush2.xpose.msra.mxu0 0.0
        %1303 = vmatprep.subr.mxu0 0.0
        %1304 = vmatpush2.xpose.msra.mxu0 0.0
        %1305 = vmatprep.subr.mxu0 0.0
        %1306 = vmatpush2.xpose.msra.mxu0 0.0
        %1307 = vmatprep.subr.mxu0 0.0
        %1308 = vmatpush2.xpose.msra.mxu0 0.0
        %1309 = vmatprep.subr.mxu0 0.0
        %1310 = vmatpush2.xpose.msra.mxu0 0.0
        %1311 = vmatprep.subr.mxu0 0.0
        %1312 = vmatpush2.xpose.msra.mxu0 0.0
        %1313 = vmatprep.subr.mxu0 0.0
        %1314 = vmatpush2.xpose.msra.mxu0 0.0
        %1315 = vmatprep.subr.mxu0 0.0
        %1316 = vmatpush2.xpose.msra.mxu0 0.0
        %1317 = vmatprep.subr.mxu0 0.0
        %1318 = vmatpush2.xpose.msra.mxu0 0.0
        %1319 = vmatprep.subr.mxu0 0.0
        %1320 = vmatpush2.xpose.msra.mxu0 0.0
        %1321 = vmatprep.subr.mxu0 0.0
        %1322 = vmatpush2.xpose.msra.mxu0 0.0
        %1323 = vmatprep.mubr.f32.mxu0 0.0
        %1324 = vmatmul.mubr.f32.gmra.mxu0 %v1255
        %v1325 = vpop.f32.mrf.mxu0
        %v1326 = vadd.f32 0.0, %v1325
        %v1327 = vpop.f32.mrf.mxu0
        %1328 = vdwg.mxu0
        %v1329 = vsub.f32 %v1326, %v996
        %v1330 = vsel %vm999, %v1329, -inf
        %1331 = vmax.xlane.f32.xlu0 %v1330
        %v1332 = vpop.xlane.xlu0 %1331
        %v1333 = vsub.f32 %v1329, %v1332
        %v1334 = vmul.f32 %v1333, 1.442695
        %v1335 = vpow.pop %v1334
        %v1336 = vsel %vm999, %v1335, 0.0
        %1337 = vadd.xlane.f32.xlu0 %v1336
        %v1338 = vpop.xlane.xlu0 %1337
        %1339 = vrot.lane.b32.xlu0 %v908, 120
        %v1340 = vpop.permute.xlu0 %1339
        %v1343 = vsel %vm999, %v1335, 0
        %1345 = vmatprep.subr.mxu0 0.0
        %1346 = vmatpush1.msra.mxu0 0.0
        %1347 = vmatprep.subr.mxu0 0.0
        %1348 = vmatpush1.msra.mxu0 0.0
        %1349 = vmatprep.subr.mxu0 0.0
        %1350 = vmatpush1.msra.mxu0 0.0
        %1351 = vmatprep.subr.mxu0 0.0
        %1352 = vmatpush1.msra.mxu0 0.0
        %1353 = vmatprep.subr.mxu0 0.0
        %1354 = vmatpush1.msra.mxu0 0.0
        %1355 = vmatprep.subr.mxu0 0.0
        %1356 = vmatpush1.msra.mxu0 0.0
        %1357 = vmatprep.subr.mxu0 0.0
        %1358 = vmatpush1.msra.mxu0 0.0
        %1359 = vmatprep.subr.mxu0 0.0
        %1360 = vmatpush1.msra.mxu0 0.0
        %1361 = vmatprep.subr.mxu0 0.0
        %1362 = vmatpush1.msra.mxu0 0.0
        %1363 = vmatprep.subr.mxu0 0.0
        %1364 = vmatpush1.msra.mxu0 0.0
        %1365 = vmatprep.subr.mxu0 0.0
        %1366 = vmatpush1.msra.mxu0 0.0
        %1367 = vmatprep.subr.mxu0 0.0
        %1368 = vmatpush1.msra.mxu0 0.0
        %1369 = vmatprep.subr.mxu0 0.0
        %1370 = vmatpush1.msra.mxu0 0.0
        %1371 = vmatprep.subr.mxu0 0.0
        %1372 = vmatpush1.msra.mxu0 0.0
        %1373 = vmatprep.subr.mxu0 0.0
        %1374 = vmatpush1.msra.mxu0 0.0
        %1375 = vmatprep.subr.mxu0 0.0
        %1376 = vmatpush1.msra.mxu0 %v1340
        %1377 = vmatprep.subr.mxu0 0.0
        %1378 = vmatpush2.msra.mxu0 0.0
        %1379 = vmatprep.subr.mxu0 0.0
        %1380 = vmatpush2.msra.mxu0 0.0
        %1381 = vmatprep.subr.mxu0 0.0
        %1382 = vmatpush2.msra.mxu0 0.0
        %1383 = vmatprep.subr.mxu0 0.0
        %1384 = vmatpush2.msra.mxu0 0.0
        %1385 = vmatprep.subr.mxu0 0.0
        %1386 = vmatpush2.msra.mxu0 0.0
        %1387 = vmatprep.subr.mxu0 0.0
        %1388 = vmatpush2.msra.mxu0 0.0
        %1389 = vmatprep.subr.mxu0 0.0
        %1390 = vmatpush2.msra.mxu0 0.0
        %1391 = vmatprep.subr.mxu0 0.0
        %1392 = vmatpush2.msra.mxu0 0.0
        %1393 = vmatprep.subr.mxu0 0.0
        %1394 = vmatpush2.msra.mxu0 0.0
        %1395 = vmatprep.subr.mxu0 0.0
        %1396 = vmatpush2.msra.mxu0 0.0
        %1397 = vmatprep.subr.mxu0 0.0
        %1398 = vmatpush2.msra.mxu0 0.0
        %1399 = vmatprep.subr.mxu0 0.0
        %1400 = vmatpush2.msra.mxu0 0.0
        %1401 = vmatprep.subr.mxu0 0.0
        %1402 = vmatpush2.msra.mxu0 0.0
        %1403 = vmatprep.subr.mxu0 0.0
        %1404 = vmatpush2.msra.mxu0 0.0
        %1405 = vmatprep.subr.mxu0 0.0
        %1406 = vmatpush2.msra.mxu0 0.0
        %1407 = vmatprep.subr.mxu0 0.0
        %1408 = vmatpush2.msra.mxu0 0.0
        %1409 = vmatprep.mubr.f32.mxu0 0.0
        %1410 = vmatmul.mubr.f32.gmra.mxu0 %v1343
        %v1411 = vpop.f32.mrf.mxu0
        %v1412 = vadd.f32 0.0, %v1411
        %v1413 = vpop.f32.mrf.mxu0
        %1414 = vdwg.mxu0
        %v1415 = vrcp.pop %v1338
        %v1416 = vmul.f32 %v1412, %v1415
        %1417 = vrot.lane.b32.xlu0 %v742, 116
        %v1418 = vpop.permute.xlu0 %1417
        %1419 = vrot.lane.b32.xlu0 %v824, 116
        %v1420 = vpop.permute.xlu0 %1419
        %v1421 = vsel %vm915, %v1418, 0
        %v1423 = vsel %vm915, %v1420, 0
        %1425 = vmatprep.subr.mxu0 0.0
        %1426 = vmatpush1.xpose.msra.mxu0 0.0
        %1427 = vmatprep.subr.mxu0 0.0
        %1428 = vmatpush1.xpose.msra.mxu0 0.0
        %1429 = vmatprep.subr.mxu0 0.0
        %1430 = vmatpush1.xpose.msra.mxu0 0.0
        %1431 = vmatprep.subr.mxu0 0.0
        %1432 = vmatpush1.xpose.msra.mxu0 0.0
        %1433 = vmatprep.subr.mxu0 0.0
        %1434 = vmatpush1.xpose.msra.mxu0 0.0
        %1435 = vmatprep.subr.mxu0 0.0
        %1436 = vmatpush1.xpose.msra.mxu0 0.0
        %1437 = vmatprep.subr.mxu0 0.0
        %1438 = vmatpush1.xpose.msra.mxu0 0.0
        %1439 = vmatprep.subr.mxu0 0.0
        %1440 = vmatpush1.xpose.msra.mxu0 0.0
        %1441 = vmatprep.subr.mxu0 0.0
        %1442 = vmatpush1.xpose.msra.mxu0 0.0
        %1443 = vmatprep.subr.mxu0 0.0
        %1444 = vmatpush1.xpose.msra.mxu0 0.0
        %1445 = vmatprep.subr.mxu0 0.0
        %1446 = vmatpush1.xpose.msra.mxu0 0.0
        %1447 = vmatprep.subr.mxu0 0.0
        %1448 = vmatpush1.xpose.msra.mxu0 0.0
        %1449 = vmatprep.subr.mxu0 0.0
        %1450 = vmatpush1.xpose.msra.mxu0 0.0
        %1451 = vmatprep.subr.mxu0 0.0
        %1452 = vmatpush1.xpose.msra.mxu0 0.0
        %1453 = vmatprep.subr.mxu0 0.0
        %1454 = vmatpush1.xpose.msra.mxu0 0.0
        %1455 = vmatprep.subr.mxu0 0.0
        %1456 = vmatpush1.xpose.msra.mxu0 %v1423
        %1457 = vmatprep.subr.mxu0 0.0
        %1458 = vmatpush2.xpose.msra.mxu0 0.0
        %1459 = vmatprep.subr.mxu0 0.0
        %1460 = vmatpush2.xpose.msra.mxu0 0.0
        %1461 = vmatprep.subr.mxu0 0.0
        %1462 = vmatpush2.xpose.msra.mxu0 0.0
        %1463 = vmatprep.subr.mxu0 0.0
        %1464 = vmatpush2.xpose.msra.mxu0 0.0
        %1465 = vmatprep.subr.mxu0 0.0
        %1466 = vmatpush2.xpose.msra.mxu0 0.0
        %1467 = vmatprep.subr.mxu0 0.0
        %1468 = vmatpush2.xpose.msra.mxu0 0.0
        %1469 = vmatprep.subr.mxu0 0.0
        %1470 = vmatpush2.xpose.msra.mxu0 0.0
        %1471 = vmatprep.subr.mxu0 0.0
        %1472 = vmatpush2.xpose.msra.mxu0 0.0
        %1473 = vmatprep.subr.mxu0 0.0
        %1474 = vmatpush2.xpose.msra.mxu0 0.0
        %1475 = vmatprep.subr.mxu0 0.0
        %1476 = vmatpush2.xpose.msra.mxu0 0.0
        %1477 = vmatprep.subr.mxu0 0.0
        %1478 = vmatpush2.xpose.msra.mxu0 0.0
        %1479 = vmatprep.subr.mxu0 0.0
        %1480 = vmatpush2.xpose.msra.mxu0 0.0
        %1481 = vmatprep.subr.mxu0 0.0
        %1482 = vmatpush2.xpose.msra.mxu0 0.0
        %1483 = vmatprep.subr.mxu0 0.0
        %1484 = vmatpush2.xpose.msra.mxu0 0.0
        %1485 = vmatprep.subr.mxu0 0.0
        %1486 = vmatpush2.xpose.msra.mxu0 0.0
        %1487 = vmatprep.subr.mxu0 0.0
        %1488 = vmatpush2.xpose.msra.mxu0 0.0
        %1489 = vmatprep.mubr.f32.mxu0 0.0
        %1490 = vmatmul.mubr.f32.gmra.mxu0 %v1421
        %v1491 = vpop.f32.mrf.mxu0
        %v1492 = vadd.f32 0.0, %v1491
        %v1493 = vpop.f32.mrf.mxu0
        %1494 = vdwg.mxu0
        %v1495 = vsub.f32 %v1492, %v996
        %v1496 = vsel %vm999, %v1495, -inf
        %1497 = vmax.xlane.f32.xlu0 %v1496
        %v1498 = vpop.xlane.xlu0 %1497
        %v1499 = vsub.f32 %v1495, %v1498
        %v1500 = vmul.f32 %v1499, 1.442695
        %v1501 = vpow.pop %v1500
        %v1502 = vsel %vm999, %v1501, 0.0
        %1503 = vadd.xlane.f32.xlu0 %v1502
        %v1504 = vpop.xlane.xlu0 %1503
        %1505 = vrot.lane.b32.xlu0 %v908, 116
        %v1506 = vpop.permute.xlu0 %1505
        %v1509 = vsel %vm999, %v1501, 0
        %1511 = vmatprep.subr.mxu0 0.0
        %1512 = vmatpush1.msra.mxu0 0.0
        %1513 = vmatprep.subr.mxu0 0.0
        %1514 = vmatpush1.msra.mxu0 0.0
        %1515 = vmatprep.subr.mxu0 0.0
        %1516 = vmatpush1.msra.mxu0 0.0
        %1517 = vmatprep.subr.mxu0 0.0
        %1518 = vmatpush1.msra.mxu0 0.0
        %1519 = vmatprep.subr.mxu0 0.0
        %1520 = vmatpush1.msra.mxu0 0.0
        %1521 = vmatprep.subr.mxu0 0.0
        %1522 = vmatpush1.msra.mxu0 0.0
        %1523 = vmatprep.subr.mxu0 0.0
        %1524 = vmatpush1.msra.mxu0 0.0
        %1525 = vmatprep.subr.mxu0 0.0
        %1526 = vmatpush1.msra.mxu0 0.0
        %1527 = vmatprep.subr.mxu0 0.0
        %1528 = vmatpush1.msra.mxu0 0.0
        %1529 = vmatprep.subr.mxu0 0.0
        %1530 = vmatpush1.msra.mxu0 0.0
        %1531 = vmatprep.subr.mxu0 0.0
        %1532 = vmatpush1.msra.mxu0 0.0
        %1533 = vmatprep.subr.mxu0 0.0
        %1534 = vmatpush1.msra.mxu0 0.0
        %1535 = vmatprep.subr.mxu0 0.0
        %1536 = vmatpush1.msra.mxu0 0.0
        %1537 = vmatprep.subr.mxu0 0.0
        %1538 = vmatpush1.msra.mxu0 0.0
        %1539 = vmatprep.subr.mxu0 0.0
        %1540 = vmatpush1.msra.mxu0 0.0
        %1541 = vmatprep.subr.mxu0 0.0
        %1542 = vmatpush1.msra.mxu0 %v1506
        %1543 = vmatprep.subr.mxu0 0.0
        %1544 = vmatpush2.msra.mxu0 0.0
        %1545 = vmatprep.subr.mxu0 0.0
        %1546 = vmatpush2.msra.mxu0 0.0
        %1547 = vmatprep.subr.mxu0 0.0
        %1548 = vmatpush2.msra.mxu0 0.0
        %1549 = vmatprep.subr.mxu0 0.0
        %1550 = vmatpush2.msra.mxu0 0.0
        %1551 = vmatprep.subr.mxu0 0.0
        %1552 = vmatpush2.msra.mxu0 0.0
        %1553 = vmatprep.subr.mxu0 0.0
        %1554 = vmatpush2.msra.mxu0 0.0
        %1555 = vmatprep.subr.mxu0 0.0
        %1556 = vmatpush2.msra.mxu0 0.0
        %1557 = vmatprep.subr.mxu0 0.0
        %1558 = vmatpush2.msra.mxu0 0.0
        %1559 = vmatprep.subr.mxu0 0.0
        %1560 = vmatpush2.msra.mxu0 0.0
        %1561 = vmatprep.subr.mxu0 0.0
        %1562 = vmatpush2.msra.mxu0 0.0
        %1563 = vmatprep.subr.mxu0 0.0
        %1564 = vmatpush2.msra.mxu0 0.0
        %1565 = vmatprep.subr.mxu0 0.0
        %1566 = vmatpush2.msra.mxu0 0.0
        %1567 = vmatprep.subr.mxu0 0.0
        %1568 = vmatpush2.msra.mxu0 0.0
        %1569 = vmatprep.subr.mxu0 0.0
        %1570 = vmatpush2.msra.mxu0 0.0
        %1571 = vmatprep.subr.mxu0 0.0
        %1572 = vmatpush2.msra.mxu0 0.0
        %1573 = vmatprep.subr.mxu0 0.0
        %1574 = vmatpush2.msra.mxu0 0.0
        %1575 = vmatprep.mubr.f32.mxu0 0.0
        %1576 = vmatmul.mubr.f32.gmra.mxu0 %v1509
        %v1577 = vpop.f32.mrf.mxu0
        %v1578 = vadd.f32 0.0, %v1577
        %v1579 = vpop.f32.mrf.mxu0
        %1580 = vdwg.mxu0
        %v1581 = vrcp.pop %v1504
        %v1582 = vmul.f32 %v1578, %v1581
        %1583 = vrot.lane.b32.xlu0 %v742, 112
        %v1584 = vpop.permute.xlu0 %1583
        %1585 = vrot.lane.b32.xlu0 %v824, 112
        %v1586 = vpop.permute.xlu0 %1585
        %v1587 = vsel %vm915, %v1584, 0
        %v1589 = vsel %vm915, %v1586, 0
        %1591 = vmatprep.subr.mxu0 0.0
        %1592 = vmatpush1.xpose.msra.mxu0 0.0
        %1593 = vmatprep.subr.mxu0 0.0
        %1594 = vmatpush1.xpose.msra.mxu0 0.0
        %1595 = vmatprep.subr.mxu0 0.0
        %1596 = vmatpush1.xpose.msra.mxu0 0.0
        %1597 = vmatprep.subr.mxu0 0.0
        %1598 = vmatpush1.xpose.msra.mxu0 0.0
        %1599 = vmatprep.subr.mxu0 0.0
        %1600 = vmatpush1.xpose.msra.mxu0 0.0
        %1601 = vmatprep.subr.mxu0 0.0
        %1602 = vmatpush1.xpose.msra.mxu0 0.0
        %1603 = vmatprep.subr.mxu0 0.0
        %1604 = vmatpush1.xpose.msra.mxu0 0.0
        %1605 = vmatprep.subr.mxu0 0.0
        %1606 = vmatpush1.xpose.msra.mxu0 0.0
        %1607 = vmatprep.subr.mxu0 0.0
        %1608 = vmatpush1.xpose.msra.mxu0 0.0
        %1609 = vmatprep.subr.mxu0 0.0
        %1610 = vmatpush1.xpose.msra.mxu0 0.0
        %1611 = vmatprep.subr.mxu0 0.0
        %1612 = vmatpush1.xpose.msra.mxu0 0.0
        %1613 = vmatprep.subr.mxu0 0.0
        %1614 = vmatpush1.xpose.msra.mxu0 0.0
        %1615 = vmatprep.subr.mxu0 0.0
        %1616 = vmatpush1.xpose.msra.mxu0 0.0
        %1617 = vmatprep.subr.mxu0 0.0
        %1618 = vmatpush1.xpose.msra.mxu0 0.0
        %1619 = vmatprep.subr.mxu0 0.0
        %1620 = vmatpush1.xpose.msra.mxu0 0.0
        %1621 = vmatprep.subr.mxu0 0.0
        %1622 = vmatpush1.xpose.msra.mxu0 %v1589
        %1623 = vmatprep.subr.mxu0 0.0
        %1624 = vmatpush2.xpose.msra.mxu0 0.0
        %1625 = vmatprep.subr.mxu0 0.0
        %1626 = vmatpush2.xpose.msra.mxu0 0.0
        %1627 = vmatprep.subr.mxu0 0.0
        %1628 = vmatpush2.xpose.msra.mxu0 0.0
        %1629 = vmatprep.subr.mxu0 0.0
        %1630 = vmatpush2.xpose.msra.mxu0 0.0
        %1631 = vmatprep.subr.mxu0 0.0
        %1632 = vmatpush2.xpose.msra.mxu0 0.0
        %1633 = vmatprep.subr.mxu0 0.0
        %1634 = vmatpush2.xpose.msra.mxu0 0.0
        %1635 = vmatprep.subr.mxu0 0.0
        %1636 = vmatpush2.xpose.msra.mxu0 0.0
        %1637 = vmatprep.subr.mxu0 0.0
        %1638 = vmatpush2.xpose.msra.mxu0 0.0
        %1639 = vmatprep.subr.mxu0 0.0
        %1640 = vmatpush2.xpose.msra.mxu0 0.0
        %1641 = vmatprep.subr.mxu0 0.0
        %1642 = vmatpush2.xpose.msra.mxu0 0.0
        %1643 = vmatprep.subr.mxu0 0.0
        %1644 = vmatpush2.xpose.msra.mxu0 0.0
        %1645 = vmatprep.subr.mxu0 0.0
        %1646 = vmatpush2.xpose.msra.mxu0 0.0
        %1647 = vmatprep.subr.mxu0 0.0
        %1648 = vmatpush2.xpose.msra.mxu0 0.0
        %1649 = vmatprep.subr.mxu0 0.0
        %1650 = vmatpush2.xpose.msra.mxu0 0.0
        %1651 = vmatprep.subr.mxu0 0.0
        %1652 = vmatpush2.xpose.msra.mxu0 0.0
        %1653 = vmatprep.subr.mxu0 0.0
        %1654 = vmatpush2.xpose.msra.mxu0 0.0
        %1655 = vmatprep.mubr.f32.mxu0 0.0
        %1656 = vmatmul.mubr.f32.gmra.mxu0 %v1587
        %v1657 = vpop.f32.mrf.mxu0
        %v1658 = vadd.f32 0.0, %v1657
        %v1659 = vpop.f32.mrf.mxu0
        %1660 = vdwg.mxu0
        %v1661 = vsub.f32 %v1658, %v996
        %v1662 = vsel %vm999, %v1661, -inf
        %1663 = vmax.xlane.f32.xlu0 %v1662
        %v1664 = vpop.xlane.xlu0 %1663
        %v1665 = vsub.f32 %v1661, %v1664
        %v1666 = vmul.f32 %v1665, 1.442695
        %v1667 = vpow.pop %v1666
        %v1668 = vsel %vm999, %v1667, 0.0
        %1669 = vadd.xlane.f32.xlu0 %v1668
        %v1670 = vpop.xlane.xlu0 %1669
        %1671 = vrot.lane.b32.xlu0 %v908, 112
        %v1672 = vpop.permute.xlu0 %1671
        %v1675 = vsel %vm999, %v1667, 0
        %1677 = vmatprep.subr.mxu0 0.0
        %1678 = vmatpush1.msra.mxu0 0.0
        %1679 = vmatprep.subr.mxu0 0.0
        %1680 = vmatpush1.msra.mxu0 0.0
        %1681 = vmatprep.subr.mxu0 0.0
        %1682 = vmatpush1.msra.mxu0 0.0
        %1683 = vmatprep.subr.mxu0 0.0
        %1684 = vmatpush1.msra.mxu0 0.0
        %1685 = vmatprep.subr.mxu0 0.0
        %1686 = vmatpush1.msra.mxu0 0.0
        %1687 = vmatprep.subr.mxu0 0.0
        %1688 = vmatpush1.msra.mxu0 0.0
        %1689 = vmatprep.subr.mxu0 0.0
        %1690 = vmatpush1.msra.mxu0 0.0
        %1691 = vmatprep.subr.mxu0 0.0
        %1692 = vmatpush1.msra.mxu0 0.0
        %1693 = vmatprep.subr.mxu0 0.0
        %1694 = vmatpush1.msra.mxu0 0.0
        %1695 = vmatprep.subr.mxu0 0.0
        %1696 = vmatpush1.msra.mxu0 0.0
        %1697 = vmatprep.subr.mxu0 0.0
        %1698 = vmatpush1.msra.mxu0 0.0
        %1699 = vmatprep.subr.mxu0 0.0
        %1700 = vmatpush1.msra.mxu0 0.0
        %1701 = vmatprep.subr.mxu0 0.0
        %1702 = vmatpush1.msra.mxu0 0.0
        %1703 = vmatprep.subr.mxu0 0.0
        %1704 = vmatpush1.msra.mxu0 0.0
        %1705 = vmatprep.subr.mxu0 0.0
        %1706 = vmatpush1.msra.mxu0 0.0
        %1707 = vmatprep.subr.mxu0 0.0
        %1708 = vmatpush1.msra.mxu0 %v1672
        %1709 = vmatprep.subr.mxu0 0.0
        %1710 = vmatpush2.msra.mxu0 0.0
        %1711 = vmatprep.subr.mxu0 0.0
        %1712 = vmatpush2.msra.mxu0 0.0
        %1713 = vmatprep.subr.mxu0 0.0
        %1714 = vmatpush2.msra.mxu0 0.0
        %1715 = vmatprep.subr.mxu0 0.0
        %1716 = vmatpush2.msra.mxu0 0.0
        %1717 = vmatprep.subr.mxu0 0.0
        %1718 = vmatpush2.msra.mxu0 0.0
        %1719 = vmatprep.subr.mxu0 0.0
        %1720 = vmatpush2.msra.mxu0 0.0
        %1721 = vmatprep.subr.mxu0 0.0
        %1722 = vmatpush2.msra.mxu0 0.0
        %1723 = vmatprep.subr.mxu0 0.0
        %1724 = vmatpush2.msra.mxu0 0.0
        %1725 = vmatprep.subr.mxu0 0.0
        %1726 = vmatpush2.msra.mxu0 0.0
        %1727 = vmatprep.subr.mxu0 0.0
        %1728 = vmatpush2.msra.mxu0 0.0
        %1729 = vmatprep.subr.mxu0 0.0
        %1730 = vmatpush2.msra.mxu0 0.0
        %1731 = vmatprep.subr.mxu0 0.0
        %1732 = vmatpush2.msra.mxu0 0.0
        %1733 = vmatprep.subr.mxu0 0.0
        %1734 = vmatpush2.msra.mxu0 0.0
        %1735 = vmatprep.subr.mxu0 0.0
        %1736 = vmatpush2.msra.mxu0 0.0
        %1737 = vmatprep.subr.mxu0 0.0
        %1738 = vmatpush2.msra.mxu0 0.0
        %1739 = vmatprep.subr.mxu0 0.0
        %1740 = vmatpush2.msra.mxu0 0.0
        %1741 = vmatprep.mubr.f32.mxu0 0.0
        %1742 = vmatmul.mubr.f32.gmra.mxu0 %v1675
        %v1743 = vpop.f32.mrf.mxu0
        %v1744 = vadd.f32 0.0, %v1743
        %v1745 = vpop.f32.mrf.mxu0
        %1746 = vdwg.mxu0
        %v1747 = vrcp.pop %v1670
        %v1748 = vmul.f32 %v1744, %v1747
        %1749 = vrot.lane.b32.xlu0 %v742, 108
        %v1750 = vpop.permute.xlu0 %1749
        %1751 = vrot.lane.b32.xlu0 %v824, 108
        %v1752 = vpop.permute.xlu0 %1751
        %v1753 = vsel %vm915, %v1750, 0
        %v1755 = vsel %vm915, %v1752, 0
        %1757 = vmatprep.subr.mxu0 0.0
        %1758 = vmatpush1.xpose.msra.mxu0 0.0
        %1759 = vmatprep.subr.mxu0 0.0
        %1760 = vmatpush1.xpose.msra.mxu0 0.0
        %1761 = vmatprep.subr.mxu0 0.0
        %1762 = vmatpush1.xpose.msra.mxu0 0.0
        %1763 = vmatprep.subr.mxu0 0.0
        %1764 = vmatpush1.xpose.msra.mxu0 0.0
        %1765 = vmatprep.subr.mxu0 0.0
        %1766 = vmatpush1.xpose.msra.mxu0 0.0
        %1767 = vmatprep.subr.mxu0 0.0
        %1768 = vmatpush1.xpose.msra.mxu0 0.0
        %1769 = vmatprep.subr.mxu0 0.0
        %1770 = vmatpush1.xpose.msra.mxu0 0.0
        %1771 = vmatprep.subr.mxu0 0.0
        %1772 = vmatpush1.xpose.msra.mxu0 0.0
        %1773 = vmatprep.subr.mxu0 0.0
        %1774 = vmatpush1.xpose.msra.mxu0 0.0
        %1775 = vmatprep.subr.mxu0 0.0
        %1776 = vmatpush1.xpose.msra.mxu0 0.0
        %1777 = vmatprep.subr.mxu0 0.0
        %1778 = vmatpush1.xpose.msra.mxu0 0.0
        %1779 = vmatprep.subr.mxu0 0.0
        %1780 = vmatpush1.xpose.msra.mxu0 0.0
        %1781 = vmatprep.subr.mxu0 0.0
        %1782 = vmatpush1.xpose.msra.mxu0 0.0
        %1783 = vmatprep.subr.mxu0 0.0
        %1784 = vmatpush1.xpose.msra.mxu0 0.0
        %1785 = vmatprep.subr.mxu0 0.0
        %1786 = vmatpush1.xpose.msra.mxu0 0.0
        %1787 = vmatprep.subr.mxu0 0.0
        %1788 = vmatpush1.xpose.msra.mxu0 %v1755
        %1789 = vmatprep.subr.mxu0 0.0
        %1790 = vmatpush2.xpose.msra.mxu0 0.0
        %1791 = vmatprep.subr.mxu0 0.0
        %1792 = vmatpush2.xpose.msra.mxu0 0.0
        %1793 = vmatprep.subr.mxu0 0.0
        %1794 = vmatpush2.xpose.msra.mxu0 0.0
        %1795 = vmatprep.subr.mxu0 0.0
        %1796 = vmatpush2.xpose.msra.mxu0 0.0
        %1797 = vmatprep.subr.mxu0 0.0
        %1798 = vmatpush2.xpose.msra.mxu0 0.0
        %1799 = vmatprep.subr.mxu0 0.0
        %1800 = vmatpush2.xpose.msra.mxu0 0.0
        %1801 = vmatprep.subr.mxu0 0.0
        %1802 = vmatpush2.xpose.msra.mxu0 0.0
        %1803 = vmatprep.subr.mxu0 0.0
        %1804 = vmatpush2.xpose.msra.mxu0 0.0
        %1805 = vmatprep.subr.mxu0 0.0
        %1806 = vmatpush2.xpose.msra.mxu0 0.0
        %1807 = vmatprep.subr.mxu0 0.0
        %1808 = vmatpush2.xpose.msra.mxu0 0.0
        %1809 = vmatprep.subr.mxu0 0.0
        %1810 = vmatpush2.xpose.msra.mxu0 0.0
        %1811 = vmatprep.subr.mxu0 0.0
        %1812 = vmatpush2.xpose.msra.mxu0 0.0
        %1813 = vmatprep.subr.mxu0 0.0
        %1814 = vmatpush2.xpose.msra.mxu0 0.0
        %1815 = vmatprep.subr.mxu0 0.0
        %1816 = vmatpush2.xpose.msra.mxu0 0.0
        %1817 = vmatprep.subr.mxu0 0.0
        %1818 = vmatpush2.xpose.msra.mxu0 0.0
        %1819 = vmatprep.subr.mxu0 0.0
        %1820 = vmatpush2.xpose.msra.mxu0 0.0
        %1821 = vmatprep.mubr.f32.mxu0 0.0
        %1822 = vmatmul.mubr.f32.gmra.mxu0 %v1753
        %v1823 = vpop.f32.mrf.mxu0
        %v1824 = vadd.f32 0.0, %v1823
        %v1825 = vpop.f32.mrf.mxu0
        %1826 = vdwg.mxu0
        %v1827 = vsub.f32 %v1824, %v996
        %v1828 = vsel %vm999, %v1827, -inf
        %1829 = vmax.xlane.f32.xlu0 %v1828
        %v1830 = vpop.xlane.xlu0 %1829
        %v1831 = vsub.f32 %v1827, %v1830
        %v1832 = vmul.f32 %v1831, 1.442695
        %v1833 = vpow.pop %v1832
        %v1834 = vsel %vm999, %v1833, 0.0
        %1835 = vadd.xlane.f32.xlu0 %v1834
        %v1836 = vpop.xlane.xlu0 %1835
        %1837 = vrot.lane.b32.xlu0 %v908, 108
        %v1838 = vpop.permute.xlu0 %1837
        %v1841 = vsel %vm999, %v1833, 0
        %1843 = vmatprep.subr.mxu0 0.0
        %1844 = vmatpush1.msra.mxu0 0.0
        %1845 = vmatprep.subr.mxu0 0.0
        %1846 = vmatpush1.msra.mxu0 0.0
        %1847 = vmatprep.subr.mxu0 0.0
        %1848 = vmatpush1.msra.mxu0 0.0
        %1849 = vmatprep.subr.mxu0 0.0
        %1850 = vmatpush1.msra.mxu0 0.0
        %1851 = vmatprep.subr.mxu0 0.0
        %1852 = vmatpush1.msra.mxu0 0.0
        %1853 = vmatprep.subr.mxu0 0.0
        %1854 = vmatpush1.msra.mxu0 0.0
        %1855 = vmatprep.subr.mxu0 0.0
        %1856 = vmatpush1.msra.mxu0 0.0
        %1857 = vmatprep.subr.mxu0 0.0
        %1858 = vmatpush1.msra.mxu0 0.0
        %1859 = vmatprep.subr.mxu0 0.0
        %1860 = vmatpush1.msra.mxu0 0.0
        %1861 = vmatprep.subr.mxu0 0.0
        %1862 = vmatpush1.msra.mxu0 0.0
        %1863 = vmatprep.subr.mxu0 0.0
        %1864 = vmatpush1.msra.mxu0 0.0
        %1865 = vmatprep.subr.mxu0 0.0
        %1866 = vmatpush1.msra.mxu0 0.0
        %1867 = vmatprep.subr.mxu0 0.0
        %1868 = vmatpush1.msra.mxu0 0.0
        %1869 = vmatprep.subr.mxu0 0.0
        %1870 = vmatpush1.msra.mxu0 0.0
        %1871 = vmatprep.subr.mxu0 0.0
        %1872 = vmatpush1.msra.mxu0 0.0
        %1873 = vmatprep.subr.mxu0 0.0
        %1874 = vmatpush1.msra.mxu0 %v1838
        %1875 = vmatprep.subr.mxu0 0.0
        %1876 = vmatpush2.msra.mxu0 0.0
        %1877 = vmatprep.subr.mxu0 0.0
        %1878 = vmatpush2.msra.mxu0 0.0
        %1879 = vmatprep.subr.mxu0 0.0
        %1880 = vmatpush2.msra.mxu0 0.0
        %1881 = vmatprep.subr.mxu0 0.0
        %1882 = vmatpush2.msra.mxu0 0.0
        %1883 = vmatprep.subr.mxu0 0.0
        %1884 = vmatpush2.msra.mxu0 0.0
        %1885 = vmatprep.subr.mxu0 0.0
        %1886 = vmatpush2.msra.mxu0 0.0
        %1887 = vmatprep.subr.mxu0 0.0
        %1888 = vmatpush2.msra.mxu0 0.0
        %1889 = vmatprep.subr.mxu0 0.0
        %1890 = vmatpush2.msra.mxu0 0.0
        %1891 = vmatprep.subr.mxu0 0.0
        %1892 = vmatpush2.msra.mxu0 0.0
        %1893 = vmatprep.subr.mxu0 0.0
        %1894 = vmatpush2.msra.mxu0 0.0
        %1895 = vmatprep.subr.mxu0 0.0
        %1896 = vmatpush2.msra.mxu0 0.0
        %1897 = vmatprep.subr.mxu0 0.0
        %1898 = vmatpush2.msra.mxu0 0.0
        %1899 = vmatprep.subr.mxu0 0.0
        %1900 = vmatpush2.msra.mxu0 0.0
        %1901 = vmatprep.subr.mxu0 0.0
        %1902 = vmatpush2.msra.mxu0 0.0
        %1903 = vmatprep.subr.mxu0 0.0
        %1904 = vmatpush2.msra.mxu0 0.0
        %1905 = vmatprep.subr.mxu0 0.0
        %1906 = vmatpush2.msra.mxu0 0.0
        %1907 = vmatprep.mubr.f32.mxu0 0.0
        %1908 = vmatmul.mubr.f32.gmra.mxu0 %v1841
        %v1909 = vpop.f32.mrf.mxu0
        %v1910 = vadd.f32 0.0, %v1909
        %v1911 = vpop.f32.mrf.mxu0
        %1912 = vdwg.mxu0
        %v1913 = vrcp.pop %v1836
        %v1914 = vmul.f32 %v1910, %v1913
        %1915 = vrot.lane.b32.xlu0 %v742, 104
        %v1916 = vpop.permute.xlu0 %1915
        %1917 = vrot.lane.b32.xlu0 %v824, 104
        %v1918 = vpop.permute.xlu0 %1917
        %v1919 = vsel %vm915, %v1916, 0
        %v1921 = vsel %vm915, %v1918, 0
        %1923 = vmatprep.subr.mxu0 0.0
        %1924 = vmatpush1.xpose.msra.mxu0 0.0
        %1925 = vmatprep.subr.mxu0 0.0
        %1926 = vmatpush1.xpose.msra.mxu0 0.0
        %1927 = vmatprep.subr.mxu0 0.0
        %1928 = vmatpush1.xpose.msra.mxu0 0.0
        %1929 = vmatprep.subr.mxu0 0.0
        %1930 = vmatpush1.xpose.msra.mxu0 0.0
        %1931 = vmatprep.subr.mxu0 0.0
        %1932 = vmatpush1.xpose.msra.mxu0 0.0
        %1933 = vmatprep.subr.mxu0 0.0
        %1934 = vmatpush1.xpose.msra.mxu0 0.0
        %1935 = vmatprep.subr.mxu0 0.0
        %1936 = vmatpush1.xpose.msra.mxu0 0.0
        %1937 = vmatprep.subr.mxu0 0.0
        %1938 = vmatpush1.xpose.msra.mxu0 0.0
        %1939 = vmatprep.subr.mxu0 0.0
        %1940 = vmatpush1.xpose.msra.mxu0 0.0
        %1941 = vmatprep.subr.mxu0 0.0
        %1942 = vmatpush1.xpose.msra.mxu0 0.0
        %1943 = vmatprep.subr.mxu0 0.0
        %1944 = vmatpush1.xpose.msra.mxu0 0.0
        %1945 = vmatprep.subr.mxu0 0.0
        %1946 = vmatpush1.xpose.msra.mxu0 0.0
        %1947 = vmatprep.subr.mxu0 0.0
        %1948 = vmatpush1.xpose.msra.mxu0 0.0
        %1949 = vmatprep.subr.mxu0 0.0
        %1950 = vmatpush1.xpose.msra.mxu0 0.0
        %1951 = vmatprep.subr.mxu0 0.0
        %1952 = vmatpush1.xpose.msra.mxu0 0.0
        %1953 = vmatprep.subr.mxu0 0.0
        %1954 = vmatpush1.xpose.msra.mxu0 %v1921
        %1955 = vmatprep.subr.mxu0 0.0
        %1956 = vmatpush2.xpose.msra.mxu0 0.0
        %1957 = vmatprep.subr.mxu0 0.0
        %1958 = vmatpush2.xpose.msra.mxu0 0.0
        %1959 = vmatprep.subr.mxu0 0.0
        %1960 = vmatpush2.xpose.msra.mxu0 0.0
        %1961 = vmatprep.subr.mxu0 0.0
        %1962 = vmatpush2.xpose.msra.mxu0 0.0
        %1963 = vmatprep.subr.mxu0 0.0
        %1964 = vmatpush2.xpose.msra.mxu0 0.0
        %1965 = vmatprep.subr.mxu0 0.0
        %1966 = vmatpush2.xpose.msra.mxu0 0.0
        %1967 = vmatprep.subr.mxu0 0.0
        %1968 = vmatpush2.xpose.msra.mxu0 0.0
        %1969 = vmatprep.subr.mxu0 0.0
        %1970 = vmatpush2.xpose.msra.mxu0 0.0
        %1971 = vmatprep.subr.mxu0 0.0
        %1972 = vmatpush2.xpose.msra.mxu0 0.0
        %1973 = vmatprep.subr.mxu0 0.0
        %1974 = vmatpush2.xpose.msra.mxu0 0.0
        %1975 = vmatprep.subr.mxu0 0.0
        %1976 = vmatpush2.xpose.msra.mxu0 0.0
        %1977 = vmatprep.subr.mxu0 0.0
        %1978 = vmatpush2.xpose.msra.mxu0 0.0
        %1979 = vmatprep.subr.mxu0 0.0
        %1980 = vmatpush2.xpose.msra.mxu0 0.0
        %1981 = vmatprep.subr.mxu0 0.0
        %1982 = vmatpush2.xpose.msra.mxu0 0.0
        %1983 = vmatprep.subr.mxu0 0.0
        %1984 = vmatpush2.xpose.msra.mxu0 0.0
        %1985 = vmatprep.subr.mxu0 0.0
        %1986 = vmatpush2.xpose.msra.mxu0 0.0
        %1987 = vmatprep.mubr.f32.mxu0 0.0
        %1988 = vmatmul.mubr.f32.gmra.mxu0 %v1919
        %v1989 = vpop.f32.mrf.mxu0
        %v1990 = vadd.f32 0.0, %v1989
        %v1991 = vpop.f32.mrf.mxu0
        %1992 = vdwg.mxu0
        %v1993 = vsub.f32 %v1990, %v996
        %v1994 = vsel %vm999, %v1993, -inf
        %1995 = vmax.xlane.f32.xlu0 %v1994
        %v1996 = vpop.xlane.xlu0 %1995
        %v1997 = vsub.f32 %v1993, %v1996
        %v1998 = vmul.f32 %v1997, 1.442695
        %v1999 = vpow.pop %v1998
        %v2000 = vsel %vm999, %v1999, 0.0
        %2001 = vadd.xlane.f32.xlu0 %v2000
        %v2002 = vpop.xlane.xlu0 %2001
        %2003 = vrot.lane.b32.xlu0 %v908, 104
        %v2004 = vpop.permute.xlu0 %2003
        %v2007 = vsel %vm999, %v1999, 0
        %2009 = vmatprep.subr.mxu0 0.0
        %2010 = vmatpush1.msra.mxu0 0.0
        %2011 = vmatprep.subr.mxu0 0.0
        %2012 = vmatpush1.msra.mxu0 0.0
        %2013 = vmatprep.subr.mxu0 0.0
        %2014 = vmatpush1.msra.mxu0 0.0
        %2015 = vmatprep.subr.mxu0 0.0
        %2016 = vmatpush1.msra.mxu0 0.0
        %2017 = vmatprep.subr.mxu0 0.0
        %2018 = vmatpush1.msra.mxu0 0.0
        %2019 = vmatprep.subr.mxu0 0.0
        %2020 = vmatpush1.msra.mxu0 0.0
        %2021 = vmatprep.subr.mxu0 0.0
        %2022 = vmatpush1.msra.mxu0 0.0
        %2023 = vmatprep.subr.mxu0 0.0
        %2024 = vmatpush1.msra.mxu0 0.0
        %2025 = vmatprep.subr.mxu0 0.0
        %2026 = vmatpush1.msra.mxu0 0.0
        %2027 = vmatprep.subr.mxu0 0.0
        %2028 = vmatpush1.msra.mxu0 0.0
        %2029 = vmatprep.subr.mxu0 0.0
        %2030 = vmatpush1.msra.mxu0 0.0
        %2031 = vmatprep.subr.mxu0 0.0
        %2032 = vmatpush1.msra.mxu0 0.0
        %2033 = vmatprep.subr.mxu0 0.0
        %2034 = vmatpush1.msra.mxu0 0.0
        %2035 = vmatprep.subr.mxu0 0.0
        %2036 = vmatpush1.msra.mxu0 0.0
        %2037 = vmatprep.subr.mxu0 0.0
        %2038 = vmatpush1.msra.mxu0 0.0
        %2039 = vmatprep.subr.mxu0 0.0
        %2040 = vmatpush1.msra.mxu0 %v2004
        %2041 = vmatprep.subr.mxu0 0.0
        %2042 = vmatpush2.msra.mxu0 0.0
        %2043 = vmatprep.subr.mxu0 0.0
        %2044 = vmatpush2.msra.mxu0 0.0
        %2045 = vmatprep.subr.mxu0 0.0
        %2046 = vmatpush2.msra.mxu0 0.0
        %2047 = vmatprep.subr.mxu0 0.0
        %2048 = vmatpush2.msra.mxu0 0.0
        %2049 = vmatprep.subr.mxu0 0.0
        %2050 = vmatpush2.msra.mxu0 0.0
        %2051 = vmatprep.subr.mxu0 0.0
        %2052 = vmatpush2.msra.mxu0 0.0
        %2053 = vmatprep.subr.mxu0 0.0
        %2054 = vmatpush2.msra.mxu0 0.0
        %2055 = vmatprep.subr.mxu0 0.0
        %2056 = vmatpush2.msra.mxu0 0.0
        %2057 = vmatprep.subr.mxu0 0.0
        %2058 = vmatpush2.msra.mxu0 0.0
        %2059 = vmatprep.subr.mxu0 0.0
        %2060 = vmatpush2.msra.mxu0 0.0
        %2061 = vmatprep.subr.mxu0 0.0
        %2062 = vmatpush2.msra.mxu0 0.0
        %2063 = vmatprep.subr.mxu0 0.0
        %2064 = vmatpush2.msra.mxu0 0.0
        %2065 = vmatprep.subr.mxu0 0.0
        %2066 = vmatpush2.msra.mxu0 0.0
        %2067 = vmatprep.subr.mxu0 0.0
        %2068 = vmatpush2.msra.mxu0 0.0
        %2069 = vmatprep.subr.mxu0 0.0
        %2070 = vmatpush2.msra.mxu0 0.0
        %2071 = vmatprep.subr.mxu0 0.0
        %2072 = vmatpush2.msra.mxu0 0.0
        %2073 = vmatprep.mubr.f32.mxu0 0.0
        %2074 = vmatmul.mubr.f32.gmra.mxu0 %v2007
        %v2075 = vpop.f32.mrf.mxu0
        %v2076 = vadd.f32 0.0, %v2075
        %v2077 = vpop.f32.mrf.mxu0
        %2078 = vdwg.mxu0
        %v2079 = vrcp.pop %v2002
        %v2080 = vmul.f32 %v2076, %v2079
        %2081 = vrot.lane.b32.xlu0 %v742, 100
        %v2082 = vpop.permute.xlu0 %2081
        %2083 = vrot.lane.b32.xlu0 %v824, 100
        %v2084 = vpop.permute.xlu0 %2083
        %v2085 = vsel %vm915, %v2082, 0
        %v2087 = vsel %vm915, %v2084, 0
        %2089 = vmatprep.subr.mxu0 0.0
        %2090 = vmatpush1.xpose.msra.mxu0 0.0
        %2091 = vmatprep.subr.mxu0 0.0
        %2092 = vmatpush1.xpose.msra.mxu0 0.0
        %2093 = vmatprep.subr.mxu0 0.0
        %2094 = vmatpush1.xpose.msra.mxu0 0.0
        %2095 = vmatprep.subr.mxu0 0.0
        %2096 = vmatpush1.xpose.msra.mxu0 0.0
        %2097 = vmatprep.subr.mxu0 0.0
        %2098 = vmatpush1.xpose.msra.mxu0 0.0
        %2099 = vmatprep.subr.mxu0 0.0
        %2100 = vmatpush1.xpose.msra.mxu0 0.0
        %2101 = vmatprep.subr.mxu0 0.0
        %2102 = vmatpush1.xpose.msra.mxu0 0.0
        %2103 = vmatprep.subr.mxu0 0.0
        %2104 = vmatpush1.xpose.msra.mxu0 0.0
        %2105 = vmatprep.subr.mxu0 0.0
        %2106 = vmatpush1.xpose.msra.mxu0 0.0
        %2107 = vmatprep.subr.mxu0 0.0
        %2108 = vmatpush1.xpose.msra.mxu0 0.0
        %2109 = vmatprep.subr.mxu0 0.0
        %2110 = vmatpush1.xpose.msra.mxu0 0.0
        %2111 = vmatprep.subr.mxu0 0.0
        %2112 = vmatpush1.xpose.msra.mxu0 0.0
        %2113 = vmatprep.subr.mxu0 0.0
        %2114 = vmatpush1.xpose.msra.mxu0 0.0
        %2115 = vmatprep.subr.mxu0 0.0
        %2116 = vmatpush1.xpose.msra.mxu0 0.0
        %2117 = vmatprep.subr.mxu0 0.0
        %2118 = vmatpush1.xpose.msra.mxu0 0.0
        %2119 = vmatprep.subr.mxu0 0.0
        %2120 = vmatpush1.xpose.msra.mxu0 %v2087
        %2121 = vmatprep.subr.mxu0 0.0
        %2122 = vmatpush2.xpose.msra.mxu0 0.0
        %2123 = vmatprep.subr.mxu0 0.0
        %2124 = vmatpush2.xpose.msra.mxu0 0.0
        %2125 = vmatprep.subr.mxu0 0.0
        %2126 = vmatpush2.xpose.msra.mxu0 0.0
        %2127 = vmatprep.subr.mxu0 0.0
        %2128 = vmatpush2.xpose.msra.mxu0 0.0
        %2129 = vmatprep.subr.mxu0 0.0
        %2130 = vmatpush2.xpose.msra.mxu0 0.0
        %2131 = vmatprep.subr.mxu0 0.0
        %2132 = vmatpush2.xpose.msra.mxu0 0.0
        %2133 = vmatprep.subr.mxu0 0.0
        %2134 = vmatpush2.xpose.msra.mxu0 0.0
        %2135 = vmatprep.subr.mxu0 0.0
        %2136 = vmatpush2.xpose.msra.mxu0 0.0
        %2137 = vmatprep.subr.mxu0 0.0
        %2138 = vmatpush2.xpose.msra.mxu0 0.0
        %2139 = vmatprep.subr.mxu0 0.0
        %2140 = vmatpush2.xpose.msra.mxu0 0.0
        %2141 = vmatprep.subr.mxu0 0.0
        %2142 = vmatpush2.xpose.msra.mxu0 0.0
        %2143 = vmatprep.subr.mxu0 0.0
        %2144 = vmatpush2.xpose.msra.mxu0 0.0
        %2145 = vmatprep.subr.mxu0 0.0
        %2146 = vmatpush2.xpose.msra.mxu0 0.0
        %2147 = vmatprep.subr.mxu0 0.0
        %2148 = vmatpush2.xpose.msra.mxu0 0.0
        %2149 = vmatprep.subr.mxu0 0.0
        %2150 = vmatpush2.xpose.msra.mxu0 0.0
        %2151 = vmatprep.subr.mxu0 0.0
        %2152 = vmatpush2.xpose.msra.mxu0 0.0
        %2153 = vmatprep.mubr.f32.mxu0 0.0
        %2154 = vmatmul.mubr.f32.gmra.mxu0 %v2085
        %v2155 = vpop.f32.mrf.mxu0
        %v2156 = vadd.f32 0.0, %v2155
        %v2157 = vpop.f32.mrf.mxu0
        %2158 = vdwg.mxu0
        %v2159 = vsub.f32 %v2156, %v996
        %v2160 = vsel %vm999, %v2159, -inf
        %2161 = vmax.xlane.f32.xlu0 %v2160
        %v2162 = vpop.xlane.xlu0 %2161
        %v2163 = vsub.f32 %v2159, %v2162
        %v2164 = vmul.f32 %v2163, 1.442695
        %v2165 = vpow.pop %v2164
        %v2166 = vsel %vm999, %v2165, 0.0
        %2167 = vadd.xlane.f32.xlu0 %v2166
        %v2168 = vpop.xlane.xlu0 %2167
        %2169 = vrot.lane.b32.xlu0 %v908, 100
        %v2170 = vpop.permute.xlu0 %2169
        %v2173 = vsel %vm999, %v2165, 0
        %2175 = vmatprep.subr.mxu0 0.0
        %2176 = vmatpush1.msra.mxu0 0.0
        %2177 = vmatprep.subr.mxu0 0.0
        %2178 = vmatpush1.msra.mxu0 0.0
        %2179 = vmatprep.subr.mxu0 0.0
        %2180 = vmatpush1.msra.mxu0 0.0
        %2181 = vmatprep.subr.mxu0 0.0
        %2182 = vmatpush1.msra.mxu0 0.0
        %2183 = vmatprep.subr.mxu0 0.0
        %2184 = vmatpush1.msra.mxu0 0.0
        %2185 = vmatprep.subr.mxu0 0.0
        %2186 = vmatpush1.msra.mxu0 0.0
        %2187 = vmatprep.subr.mxu0 0.0
        %2188 = vmatpush1.msra.mxu0 0.0
        %2189 = vmatprep.subr.mxu0 0.0
        %2190 = vmatpush1.msra.mxu0 0.0
        %2191 = vmatprep.subr.mxu0 0.0
        %2192 = vmatpush1.msra.mxu0 0.0
        %2193 = vmatprep.subr.mxu0 0.0
        %2194 = vmatpush1.msra.mxu0 0.0
        %2195 = vmatprep.subr.mxu0 0.0
        %2196 = vmatpush1.msra.mxu0 0.0
        %2197 = vmatprep.subr.mxu0 0.0
        %2198 = vmatpush1.msra.mxu0 0.0
        %2199 = vmatprep.subr.mxu0 0.0
        %2200 = vmatpush1.msra.mxu0 0.0
        %2201 = vmatprep.subr.mxu0 0.0
        %2202 = vmatpush1.msra.mxu0 0.0
        %2203 = vmatprep.subr.mxu0 0.0
        %2204 = vmatpush1.msra.mxu0 0.0
        %2205 = vmatprep.subr.mxu0 0.0
        %2206 = vmatpush1.msra.mxu0 %v2170
        %2207 = vmatprep.subr.mxu0 0.0
        %2208 = vmatpush2.msra.mxu0 0.0
        %2209 = vmatprep.subr.mxu0 0.0
        %2210 = vmatpush2.msra.mxu0 0.0
        %2211 = vmatprep.subr.mxu0 0.0
        %2212 = vmatpush2.msra.mxu0 0.0
        %2213 = vmatprep.subr.mxu0 0.0
        %2214 = vmatpush2.msra.mxu0 0.0
        %2215 = vmatprep.subr.mxu0 0.0
        %2216 = vmatpush2.msra.mxu0 0.0
        %2217 = vmatprep.subr.mxu0 0.0
        %2218 = vmatpush2.msra.mxu0 0.0
        %2219 = vmatprep.subr.mxu0 0.0
        %2220 = vmatpush2.msra.mxu0 0.0
        %2221 = vmatprep.subr.mxu0 0.0
        %2222 = vmatpush2.msra.mxu0 0.0
        %2223 = vmatprep.subr.mxu0 0.0
        %2224 = vmatpush2.msra.mxu0 0.0
        %2225 = vmatprep.subr.mxu0 0.0
        %2226 = vmatpush2.msra.mxu0 0.0
        %2227 = vmatprep.subr.mxu0 0.0
        %2228 = vmatpush2.msra.mxu0 0.0
        %2229 = vmatprep.subr.mxu0 0.0
        %2230 = vmatpush2.msra.mxu0 0.0
        %2231 = vmatprep.subr.mxu0 0.0
        %2232 = vmatpush2.msra.mxu0 0.0
        %2233 = vmatprep.subr.mxu0 0.0
        %2234 = vmatpush2.msra.mxu0 0.0
        %2235 = vmatprep.subr.mxu0 0.0
        %2236 = vmatpush2.msra.mxu0 0.0
        %2237 = vmatprep.subr.mxu0 0.0
        %2238 = vmatpush2.msra.mxu0 0.0
        %2239 = vmatprep.mubr.f32.mxu0 0.0
        %2240 = vmatmul.mubr.f32.gmra.mxu0 %v2173
        %v2241 = vpop.f32.mrf.mxu0
        %v2242 = vadd.f32 0.0, %v2241
        %v2243 = vpop.f32.mrf.mxu0
        %2244 = vdwg.mxu0
        %v2245 = vrcp.pop %v2168
        %v2246 = vmul.f32 %v2242, %v2245
        %2248 = vrot.lane.b32.xlu0 %v1250, 4
        %v2249 = vpop.permute.xlu0 %2248
        %2252 = vrot.lane.b32.xlu0 %v1416, 8
        %v2253 = vpop.permute.xlu0 %2252
        %2256 = vrot.lane.b32.xlu0 %v1582, 12
        %v2257 = vpop.permute.xlu0 %2256
        %2260 = vrot.lane.b32.xlu0 %v1748, 16
        %v2261 = vpop.permute.xlu0 %2260
        %2264 = vrot.lane.b32.xlu0 %v1914, 20
        %v2265 = vpop.permute.xlu0 %2264
        %2268 = vrot.lane.b32.xlu0 %v2080, 24
        %v2269 = vpop.permute.xlu0 %2268
        %2272 = vrot.lane.b32.xlu0 %v2246, 28
        %v2273 = vpop.permute.xlu0 %2272
        %v2275 = vsel %vm915, %v1083, %v2249
        %v2276 = vsel %vm999, %v2275, %v2253
        %vm2277 = vcmask 97280
        %v2278 = vsel %vm2277, %v2276, %v2257
        %vm2279 = vcmask 130048
        %v2280 = vsel %vm2279, %v2278, %v2261
        %vm2281 = vcmask 162816
        %v2282 = vsel %vm2281, %v2280, %v2265
        %vm2283 = vcmask 195584
        %v2284 = vsel %vm2283, %v2282, %v2269
        %vm2285 = vcmask 228352
        %v2286 = vsel %vm2285, %v2284, %v2273
        %v2287 = vld [vmem:[#allocation14] sm:$0xff]
        %v2288 = vld [vmem:[#allocation14 + $0x8] sm:$0xff]
        %v2289 = vld [vmem:[#allocation14 + $0x10] sm:$0xff]
        %v2290 = vld [vmem:[#allocation14 + $0x18] sm:$0xff]
        %v2291 = vld [vmem:[%s11] sm:$0x1]
        %v2293 = vlaneseq
        %v2294 = vshrl.u32 %v2293, 7
        %v2295 = vsub.s32 0, %v2294
        %v2296 = vrot.slane %v2291, %v2295
        %v2299 = vsel %vm668, %v2286, 0
        %2301 = vmatprep.subr.mxu0 0.0
        %2302 = vmatpush1.msra.mxu0 0.0
        %2303 = vmatprep.subr.mxu0 0.0
        %2304 = vmatpush1.msra.mxu0 0.0
        %2305 = vmatprep.subr.mxu0 0.0
        %2306 = vmatpush1.msra.mxu0 0.0
        %2307 = vmatprep.subr.mxu0 0.0
        %2308 = vmatpush1.msra.mxu0 0.0
        %2309 = vmatprep.subr.mxu0 0.0
        %2310 = vmatpush1.msra.mxu0 0.0
        %2311 = vmatprep.subr.mxu0 0.0
        %2312 = vmatpush1.msra.mxu0 0.0
        %2313 = vmatprep.subr.mxu0 0.0
        %2314 = vmatpush1.msra.mxu0 0.0
        %2315 = vmatprep.subr.mxu0 0.0
        %2316 = vmatpush1.msra.mxu0 0.0
        %2317 = vmatprep.subr.mxu0 0.0
        %2318 = vmatpush1.msra.mxu0 0.0
        %2319 = vmatprep.subr.mxu0 0.0
        %2320 = vmatpush1.msra.mxu0 0.0
        %2321 = vmatprep.subr.mxu0 0.0
        %2322 = vmatpush1.msra.mxu0 0.0
        %2323 = vmatprep.subr.mxu0 0.0
        %2324 = vmatpush1.msra.mxu0 0.0
        %2325 = vmatprep.subr.mxu0 0.0
        %2326 = vmatpush1.msra.mxu0 %v2290
        %2327 = vmatprep.subr.mxu0 0.0
        %2328 = vmatpush1.msra.mxu0 %v2289
        %2329 = vmatprep.subr.mxu0 0.0
        %2330 = vmatpush1.msra.mxu0 %v2288
        %2331 = vmatprep.subr.mxu0 0.0
        %2332 = vmatpush1.msra.mxu0 %v2287
        %2333 = vmatprep.subr.mxu0 0.0
        %2334 = vmatpush2.msra.mxu0 0.0
        %2335 = vmatprep.subr.mxu0 0.0
        %2336 = vmatpush2.msra.mxu0 0.0
        %2337 = vmatprep.subr.mxu0 0.0
        %2338 = vmatpush2.msra.mxu0 0.0
        %2339 = vmatprep.subr.mxu0 0.0
        %2340 = vmatpush2.msra.mxu0 0.0
        %2341 = vmatprep.subr.mxu0 0.0
        %2342 = vmatpush2.msra.mxu0 0.0
        %2343 = vmatprep.subr.mxu0 0.0
        %2344 = vmatpush2.msra.mxu0 0.0
        %2345 = vmatprep.subr.mxu0 0.0
        %2346 = vmatpush2.msra.mxu0 0.0
        %2347 = vmatprep.subr.mxu0 0.0
        %2348 = vmatpush2.msra.mxu0 0.0
        %2349 = vmatprep.subr.mxu0 0.0
        %2350 = vmatpush2.msra.mxu0 0.0
        %2351 = vmatprep.subr.mxu0 0.0
        %2352 = vmatpush2.msra.mxu0 0.0
        %2353 = vmatprep.subr.mxu0 0.0
        %2354 = vmatpush2.msra.mxu0 0.0
        %2355 = vmatprep.subr.mxu0 0.0
        %2356 = vmatpush2.msra.mxu0 0.0
        %2357 = vmatprep.subr.mxu0 0.0
        %2358 = vmatpush2.msra.mxu0 0.0
        %2359 = vmatprep.subr.mxu0 0.0
        %2360 = vmatpush2.msra.mxu0 0.0
        %2361 = vmatprep.subr.mxu0 0.0
        %2362 = vmatpush2.msra.mxu0 0.0
        %2363 = vmatprep.subr.mxu0 0.0
        %2364 = vmatpush2.msra.mxu0 0.0
        %2365 = vmatprep.mubr.f32.mxu0 0.0
        %2366 = vmatmul.mubr.f32.gmra.mxu0 %v2299
        %v2367 = vpop.f32.mrf.mxu0
        %v2368 = vadd.f32 %v2296, %v2367
        %v2369 = vpop.f32.mrf.mxu0
        %2370 = vdwg.mxu0
        %v2371 = vadd.f32 %v2368, %v654
        %v2372 = vsel %vm668, %v2371, 0.0
        %2373 = vadd.xlane.f32.xlu0 %v2372
        %v2374 = vpop.xlane.xlu0 %2373
        %v2375 = vrcp.pop 32.0
        %v2376 = vmul.f32 %v2374, %v2375
        %v2377 = vsub.f32 %v2371, %v2376
        %v2378 = vmul.f32 %v2377, %v2377
        %v2379 = vsel %vm668, %v2378, 0.0
        %2380 = vadd.xlane.f32.xlu0 %v2379
        %v2381 = vpop.xlane.xlu0 %2380
        %v2382 = vmul.f32 %v2381, %v2375
        %v2383 = vadd.f32 %v2382, 1e-05
        %v2384 = vrsqrt.pop %v2383
        %v2385 = vmul.f32 %v2377, %v2384
        %v2386 = vld [vmem:[%s12] sm:$0x1]
        %v2388 = vlaneseq
        %v2389 = vshrl.u32 %v2388, 7
        %v2390 = vsub.s32 0, %v2389
        %v2391 = vrot.slane %v2386, %v2390
        %v2393 = vmul.f32 %v2385, %v2391
        %v2394 = vld [vmem:[%s13] sm:$0x1]
        %v2396 = vlaneseq
        %v2397 = vshrl.u32 %v2396, 7
        %v2398 = vsub.s32 0, %v2397
        %v2399 = vrot.slane %v2394, %v2398
        %v2401 = vadd.f32 %v2393, %v2399
        %2402 = vst.msk [vmem:[%s650] sm:$0xff] %vm668, %v2401
        %s2403 = sand.u32 %s381, 1
        %s2404 = scalar_lea.sflag [#allocation5], %s2403
        %s2405 = sand.u32 %s381, 1
        %s2406 = smul.addr %s2405, 8
        %s2407 = scalar_lea.vmem [#allocation15], %s2406
        // Predicated region
        $region109: #{tpu_custom_call.1} parent=79 // pred_check
          %p2408 = pneg %p391
        $region110: #{tpu_custom_call.1} parent=79 // pred_check_branch
          %2410 = sbr.rel (%p2408) target = $region112
        $region111: #{tpu_custom_call.1} parent=79 // pred_region
          %s2412 = ssub.s32 128, 128
          %2413 = vsyncadd %s2404, %s2412
          %s2414 = smul.addr %s38, 128
          %s2415 = scalar_lea.hbm %s15, %s2414
          %s2417 = sshll.u32 %s2407, 4
          %s2418 = int_to_ptr.vmem [resolvable:$true] %s2417
          %2420 = dma.vmem_to_hbm [thread:$0]  %s2418, 128, %s2415, %s2404
        $region112: #{tpu_custom_call.1} parent=79 // pred_fallthru
          _
      $region80: #{tpu_custom_call.1} parent=5 // pred_fallthru
        _
      %p2421 = scmp.le.s32.totalorder 2, %s33
      // Predicated region
      $region113: #{tpu_custom_call.1} parent=5 // pred_check
        %p2422 = pneg %p2421
      $region114: #{tpu_custom_call.1} parent=5 // pred_check_branch
        %2424 = sbr.rel (%p2422) target = $region116
      $region115: #{tpu_custom_call.1} parent=5 // pred_region
        %s2425 = ssub.s32 %s33, 2
        // Predicated region
        $region117: #{tpu_custom_call.1} parent=115 // pred_check
          %p2426 = pneg %p397
        $region118: #{tpu_custom_call.1} parent=115 // pred_check_branch
          %2428 = sbr.rel (%p2426) target = $region120
        $region119: #{tpu_custom_call.1} parent=115 // pred_region
          %s2429 = sand.u32 %s382, 1
          %s2430 = scalar_lea.sflag [#allocation5], %s2429
          %s2431 = sand.u32 %s382, 1
          %s2432 = smul.addr %s2431, 8
          %s2433 = scalar_lea.vmem [#allocation15], %s2432
          %2434 = dma.done %s2430, 128
        $region120: #{tpu_custom_call.1} parent=115 // pred_fallthru
          _
      $region116: #{tpu_custom_call.1} parent=5 // pred_fallthru
        _
    $region6: #{tpu_custom_call.1} parent=1 // loop_footer
      %s37 = sadd.s32 1, %s33
    $region7: #{tpu_custom_call.1} parent=1 // loop_footer_branch
      %32 = sbr.rel target = $region3
    $region8: #{tpu_custom_call.1} parent=1 // loop_exit
      _
    %2435 = vsyncpa [#allocation4], 1
    %s2436 = scalar_lea.sflag [#allocation4], 1
    %2437 = vsyncpa %s2436, 1
    %2438 = vsyncpa [#allocation7], 1
    %s2439 = scalar_lea.sflag [#allocation7], 1
    %2440 = vsyncpa %s2439, 1
    %2441 = vsyncpa [#allocation10], 1
    %2442 = vsyncpa [#allocation13], 1
    %2443 = vsyncpa [#allocation5], 1
    %s2444 = scalar_lea.sflag [#allocation5], 1
    %2445 = vsyncpa %s2444, 1

</llo_original>
